<compile_context>
chip_gen: v5e
topology: v5e:2x2
jax: 0.10.0
libtpu: 0.0.40
codegen_flags: <defaults>
</compile_context>

<pallas_src>
import functools

import jax
import jax.numpy as jnp
from jax import lax
from jax.experimental import pallas as pl
from jax.experimental.pallas import tpu as pltpu

_LANE = 128


def _routing_kernel(x_ref, w_ref, b_ref, o_ref, *, groups, capsules,
                    in_channels, out_channels, iters, strip):
    """x_ref: (G*Cin, T) input block, spatial on lanes.
    w_ref: (G, CAP*CO, Cin) per-group weights (capsule-major rows).
    b_ref: (CAP*CO, 1) f32 bias.  o_ref: (CAP*CO, T) output block."""
    G, CAP, CO, Cin = groups, capsules, out_channels, in_channels
    T = x_ref.shape[-1]
    n_strips = T // strip          # static; tile is a multiple of strip

    def strip_body(s):
        if isinstance(s, int):
            off = s * strip
        else:
            off = pl.multiple_of(s * strip, _LANE)

        # ---- grouped 1x1 conv: MXU dots, f32 accumulation ----
        con = [[None] * G for _ in range(CAP)]
        for g in range(G):
            xg = x_ref[g * Cin:(g + 1) * Cin, pl.ds(off, strip)]  # (Cin, S)
            if CAP == 1 or CO % 8 == 0:
                cg = jnp.dot(w_ref[g], xg,
                             preferred_element_type=jnp.float32,
                             precision=lax.Precision.HIGHEST)     # (CAP*CO, S)
                if CAP == 1:
                    con[0][g] = cg
                else:
                    for k in range(CAP):
                        con[k][g] = cg[k * CO:(k + 1) * CO, :]    # aligned slice
            else:
                for k in range(CAP):
                    wkg = w_ref[g, k * CO:(k + 1) * CO, :]        # (CO, Cin)
                    con[k][g] = jnp.dot(wkg, xg,
                                        preferred_element_type=jnp.float32,
                                        precision=lax.Precision.HIGHEST)

        # ---- dynamic routing (iters / CAP / G static -> unrolled) ----
        beta = [[None] * G for _ in range(CAP)]     # None == 0.0
        for it in range(iters):
            last = (it == iters - 1)
            if it == 0:
                # beta == 0 -> alpha is a compile-time constant.
                a0 = 0.5 if CAP == 1 else 1.0 / CAP
                v = []
                for k in range(CAP):
                    acc = con[k][0]
                    for g in range(1, G):
                        acc = acc + con[k][g]
                    v.append(a0 * acc)
            else:
                v = [None] * CAP
                for g in range(G):
                    if CAP == 1:
                        ag = [jax.nn.sigmoid(beta[0][g])]
                    else:
                        m = beta[0][g]
                        for k in range(1, CAP):
                            m = jnp.maximum(m, beta[k][g])
                        e = [jnp.exp(beta[k][g] - m) for k in range(CAP)]
                        den = e[0]
                        for k in range(1, CAP):
                            den = den + e[k]
                        inv = 1.0 / den
                        ag = [e[k] * inv for k in range(CAP)]
                    for k in range(CAP):
                        t = ag[k] * con[k][g]
                        v[k] = t if v[k] is None else v[k] + t

            if last:
                for k in range(CAP):
                    out = v[k] + b_ref[k * CO:(k + 1) * CO, :]
                    o_ref[k * CO:(k + 1) * CO, pl.ds(off, strip)] = (
                        out.astype(o_ref.dtype))
            else:
                for k in range(CAP):
                    # F.normalize(v, dim=channel): v / max(||v||_2, 1e-12)
                    ss = jnp.sum(v[k] * v[k], axis=0, keepdims=True)   # (1, S)
                    vn = v[k] * lax.rsqrt(jnp.maximum(ss, 1e-24))
                    for g in range(G):
                        d = jnp.sum(vn * con[k][g], axis=0, keepdims=True)
                        beta[k][g] = d if beta[k][g] is None else beta[k][g] + d

    if n_strips == 1:
        strip_body(0)
    else:
        def fori_body(s, carry):
            strip_body(s)
            return carry
        lax.fori_loop(0, n_strips, fori_body, 0)


def _conv1x1_kernel(x_ref, w_ref, b_ref, o_ref):
    """Dense 1x1 conv (iters == 1 path): x (Ct, T), w (Co, Ct), b (Co, 1)."""
    acc = jnp.dot(w_ref[...], x_ref[...],
                  preferred_element_type=jnp.float32,
                  precision=lax.Precision.HIGHEST)
    o_ref[...] = (acc + b_ref[...]).astype(o_ref.dtype)


def dynamic_routing_2d(x_nchw, weight, bias, *, capsules, groups, iters):
    """Forward of DynamicRouting2d.

    x_nchw: (N, groups*in_channels, H, W)  [NCHW, as in PyTorch]
    weight: (capsules*out_channels, groups*in_channels, 1, 1)
    bias:   (capsules*out_channels,) or None
    returns (N, capsules*out_channels, H, W), dtype matching x.
    """
    N, c_total, H, W = x_nchw.shape
    in_channels = c_total // groups
    cap_co = weight.shape[0]
    out_channels = cap_co // capsules
    HW = H * W
    dtype = x_nchw.dtype
    itemsize = jnp.dtype(dtype).itemsize

    # Strip size: keep the per-strip routing live set (~con + v + beta rows)
    # around <= 40 vregs of the 64-vreg file.
    vregs_per_128 = (cap_co * groups + cap_co + 8 + 7) // 8 \
        + (capsules * groups + capsules + 2)
    strip = (40 * _LANE) // max(1, vregs_per_128)
    strip = max(_LANE, min(512, (strip // _LANE) * _LANE))

    # Spatial tile: VMEM-budgeted block (amortize ~0.35us per-grid-step
    # overhead).  Budget ~8 MiB for double-buffered x+out blocks.
    budget = 8 * 1024 * 1024
    bpl = 2 * (c_total + cap_co) * itemsize
    tile = max(_LANE, (budget // bpl) // _LANE * _LANE)
    tile = min(tile, 16384, pl.cdiv(HW, _LANE) * _LANE)
    if tile >= strip:
        tile = (tile // strip) * strip
    else:
        strip = tile
    # v7x megacore: keep >= 2 grid steps whenever possible.
    if N * pl.cdiv(HW, tile) < 2 and tile >= 2 * strip:
        tile = (tile // (2 * strip)) * strip

    grid = (N, pl.cdiv(HW, tile))

    # No padding, no output slice: ragged tail block handled by Pallas.
    x3 = x_nchw.reshape(N, c_total, HW)
    b2 = (bias if bias is not None
          else jnp.zeros((cap_co,), jnp.float32)).astype(jnp.float32)
    b2 = b2.reshape(cap_co, 1)

    out_shape = jax.ShapeDtypeStruct((N, cap_co, HW), dtype)
    cparams = pltpu.CompilerParams(
        dimension_semantics=("parallel", "parallel"),
        vmem_limit_bytes=32 * 1024 * 1024)

    if iters == 1:
        w2 = weight.reshape(cap_co, c_total).astype(dtype)
        out3 = pl.pallas_call(
            _conv1x1_kernel,
            out_shape=out_shape,
            grid_spec=pltpu.PrefetchScalarGridSpec(
                num_scalar_prefetch=0, grid=grid,
                in_specs=[
                    pl.BlockSpec((None, c_total, tile), lambda n, t: (n, 0, t)),
                    pl.BlockSpec((cap_co, c_total), lambda n, t: (0, 0)),
                    pl.BlockSpec((cap_co, 1), lambda n, t: (0, 0)),
                ],
                out_specs=pl.BlockSpec((None, cap_co, tile),
                                       lambda n, t: (n, 0, t))),
            compiler_params=cparams,
        )(x3, w2, b2)
    else:
        # w_pg[g, k*CO + o, c] = weight[k*CO + o, g*Cin + c]
        w_pg = weight.reshape(cap_co, groups, in_channels).transpose(1, 0, 2)
        w_pg = w_pg.astype(dtype)
        kernel = functools.partial(
            _routing_kernel, groups=groups, capsules=capsules,
            in_channels=in_channels, out_channels=out_channels,
            iters=iters, strip=strip)
        out3 = pl.pallas_call(
            kernel,
            out_shape=out_shape,
            grid_spec=pltpu.PrefetchScalarGridSpec(
                num_scalar_prefetch=0, grid=grid,
                in_specs=[
                    pl.BlockSpec((None, c_total, tile), lambda n, t: (n, 0, t)),
                    pl.BlockSpec((groups, cap_co, in_channels),
                                 lambda n, t: (0, 0, 0)),
                    pl.BlockSpec((cap_co, 1), lambda n, t: (0, 0)),
                ],
                out_specs=pl.BlockSpec((None, cap_co, tile),
                                       lambda n, t: (n, 0, t))),
            compiler_params=cparams,
        )(x3, w_pg, b2)

    return out3.reshape(N, cap_co, H, W)


def _reference(x_nchw, weight, bias, *, capsules, groups, iters):
    """Pure-JAX mirror of the PyTorch forward (for verification)."""
    N, c_total, H, W = x_nchw.shape
    in_channels = c_total // groups
    cap_co = weight.shape[0]
    out_channels = cap_co // capsules
    hi = lax.Precision.HIGHEST
    b = bias if bias is not None else jnp.zeros((cap_co,), jnp.float32)
    if iters == 1:
        w = weight.reshape(cap_co, c_total)
        con = jnp.einsum('nchw,oc->nohw', x_nchw, w, precision=hi)
        return con + b.reshape(1, cap_co, 1, 1)
    w = weight.reshape(cap_co, groups, in_channels)
    xg = x_nchw.reshape(N, groups, in_channels, H, W)
    con = jnp.einsum('ngchw,ogc->ngohw', xg, w, precision=hi)
    con = con.reshape(N, groups, capsules, out_channels, H, W)
    beta = jnp.zeros((1, 1, capsules, 1, 1, 1), jnp.float32)
    for i in range(iters):
        alpha = (jax.nn.sigmoid(beta) if capsules == 1
                 else jax.nn.softmax(beta, axis=2))
        v = jnp.sum(alpha * con, axis=1, keepdims=True)
        if i == iters - 1:
            v = v.reshape(N, cap_co, H, W)
            return v + b.reshape(1, cap_co, 1, 1)
        norm = jnp.sqrt(jnp.sum(v * v, axis=3, keepdims=True))
        v = v / jnp.maximum(norm, 1e-12)
        beta = beta + jnp.sum(v * con, axis=3, keepdims=True)


def _make_params(key, in_channels, out_channels, capsules, groups):
    # kaiming_normal_ on (capsules*out_channels, groups*in_channels, 1, 1):
    # std = sqrt(2 / fan_in), fan_in = groups*in_channels.
    kw, kb = jax.random.split(key)
    fan_in = groups * in_channels
    w = jax.random.normal(
        kw, (capsules * out_channels, groups * in_channels, 1, 1),
        jnp.float32) * jnp.sqrt(2.0 / fan_in)
    b = 0.1 * jax.random.normal(kb, (capsules * out_channels,), jnp.float32)
    return w, b


def _run_and_check(x, w, b, *, capsules, groups, iters, tag):
    out = jax.block_until_ready(
        dynamic_routing_2d(x, w, b, capsules=capsules, groups=groups,
                           iters=iters))
    ref = _reference(x, w, b, capsules=capsules, groups=groups, iters=iters)
    assert out.shape == ref.shape, tag
    assert bool(jnp.allclose(out, ref, rtol=1e-3, atol=1e-3)), tag
    return out


if __name__ == "__main__":
    key = jax.random.PRNGKey(0)
    kx, kw1, kw2, kx2, kx3, kw3 = jax.random.split(key, 6)

    N, H, W = 2, 16, 16
    groups, in_channels = 4, 4
    x = jax.random.normal(kx, (N, groups * in_channels, H, W), jnp.float32)

    # config 1: capsules=1 (sigmoid routing), iters=3
    w, b = _make_params(kw1, in_channels, 8, 1, groups)
    _run_and_check(x, w, b, capsules=1, groups=groups, iters=3, tag="cfg1")

    # config 2: capsules=2 (softmax routing), iters=3
    w2, b2 = _make_params(kw2, in_channels, 4, 2, groups)
    _run_and_check(x, w2, b2, capsules=2, groups=groups, iters=3, tag="cfg2")

    # config 3: iters=1 (plain dense 1x1 conv path)
    _run_and_check(x, w, b, capsules=1, groups=groups, iters=1, tag="cfg3")

    # config 4: non-lane-aligned spatial size (H*W=100, ragged tail block)
    x4 = jax.random.normal(kx2, (N, groups * in_channels, 10, 10), jnp.float32)
    _run_and_check(x4, w2, b2, capsules=2, groups=groups, iters=3, tag="cfg4")

    # config 5: larger spatial size -> multi-tile grid, ragged last block,
    # and the fori_loop strip path inside the kernel.
    x5 = jax.random.normal(kx3, (N, groups * in_channels, 130, 128),
                           jnp.float32)
    w5, b5 = _make_params(kw3, in_channels, 4, 2, groups)
    _run_and_check(x5, w5, b5, capsules=2, groups=groups, iters=3, tag="cfg5")

    print("KERNEL_OK")
</pallas_src>

<mosaic_0001>
module attributes {stable_mosaic.version = 11 : i64} {
  func.func @_routing_kernel(%arg0: i32, %arg1: i32, %arg2: memref<1x16x256xf32, #tpu.memory_space<vmem>>, %arg3: memref<4x8x4xf32, #tpu.memory_space<vmem>>, %arg4: memref<8x1xf32, #tpu.memory_space<vmem>>, %arg5: memref<1x8x256xf32, #tpu.memory_space<vmem>>) attributes {dimension_semantics = [#tpu.dimension_semantics<parallel>, #tpu.dimension_semantics<parallel>], iteration_bounds = array<i64: 2, 1>, scalar_prefetch = 0 : i64, scratch_operands = 0 : i64, tpu.core_type = #tpu.core_type<tc>, window_params = [{transform_indices = @transform_0, window_bounds = array<i64: 1, 16, 256>}, {pipeline_mode = #tpu.pipeline_mode<synchronous>, transform_indices = @transform_1, window_bounds = array<i64: 4, 8, 4>}, {pipeline_mode = #tpu.pipeline_mode<synchronous>, transform_indices = @transform_2, window_bounds = array<i64: 8, 1>}, {transform_indices = @transform_3, window_bounds = array<i64: 1, 8, 256>}]} {
    %c0 = arith.constant 0 : index
    %c0_0 = arith.constant 0 : index
    %c0_1 = arith.constant 0 : index
    %0 = vector.load %arg2[%c0, %c0_0, %c0_1] : memref<1x16x256xf32, #tpu.memory_space<vmem>>, vector<1x4x256xf32>
    %1 = vector.shape_cast %0 : vector<1x4x256xf32> to vector<4x256xf32>
    %c0_2 = arith.constant 0 : index
    %c0_3 = arith.constant 0 : index
    %c0_4 = arith.constant 0 : index
    %2 = vector.load %arg3[%c0_2, %c0_3, %c0_4] : memref<4x8x4xf32, #tpu.memory_space<vmem>>, vector<1x8x4xf32>
    %3 = vector.shape_cast %2 : vector<1x8x4xf32> to vector<8x4xf32>
    %cst = arith.constant dense<0.000000e+00> : vector<8x256xf32>
    %4 = tpu.matmul %3, %1, %cst {dimension_numbers = #tpu.dot_dimension_numbers<[1], [0], [0], [1], [0, 0, 1, 1], [], []>, precision = #tpu.contract_precision<fp32>} : vector<8x4xf32>, vector<4x256xf32>, vector<8x256xf32> -> vector<8x256xf32>
    %c0_5 = arith.constant 0 : index
    %c4 = arith.constant 4 : index
    %c0_6 = arith.constant 0 : index
    %5 = vector.load %arg2[%c0_5, %c4, %c0_6] : memref<1x16x256xf32, #tpu.memory_space<vmem>>, vector<1x4x256xf32>
    %6 = vector.shape_cast %5 : vector<1x4x256xf32> to vector<4x256xf32>
    %c1 = arith.constant 1 : index
    %c0_7 = arith.constant 0 : index
    %c0_8 = arith.constant 0 : index
    %7 = vector.load %arg3[%c1, %c0_7, %c0_8] : memref<4x8x4xf32, #tpu.memory_space<vmem>>, vector<1x8x4xf32>
    %8 = vector.shape_cast %7 : vector<1x8x4xf32> to vector<8x4xf32>
    %cst_9 = arith.constant dense<0.000000e+00> : vector<8x256xf32>
    %9 = tpu.matmul %8, %6, %cst_9 {dimension_numbers = #tpu.dot_dimension_numbers<[1], [0], [0], [1], [0, 0, 1, 1], [], []>, precision = #tpu.contract_precision<fp32>} : vector<8x4xf32>, vector<4x256xf32>, vector<8x256xf32> -> vector<8x256xf32>
    %c0_10 = arith.constant 0 : index
    %c8 = arith.constant 8 : index
    %c0_11 = arith.constant 0 : index
    %10 = vector.load %arg2[%c0_10, %c8, %c0_11] : memref<1x16x256xf32, #tpu.memory_space<vmem>>, vector<1x4x256xf32>
    %11 = vector.shape_cast %10 : vector<1x4x256xf32> to vector<4x256xf32>
    %c2 = arith.constant 2 : index
    %c0_12 = arith.constant 0 : index
    %c0_13 = arith.constant 0 : index
    %12 = vector.load %arg3[%c2, %c0_12, %c0_13] : memref<4x8x4xf32, #tpu.memory_space<vmem>>, vector<1x8x4xf32>
    %13 = vector.shape_cast %12 : vector<1x8x4xf32> to vector<8x4xf32>
    %cst_14 = arith.constant dense<0.000000e+00> : vector<8x256xf32>
    %14 = tpu.matmul %13, %11, %cst_14 {dimension_numbers = #tpu.dot_dimension_numbers<[1], [0], [0], [1], [0, 0, 1, 1], [], []>, precision = #tpu.contract_precision<fp32>} : vector<8x4xf32>, vector<4x256xf32>, vector<8x256xf32> -> vector<8x256xf32>
    %c0_15 = arith.constant 0 : index
    %c12 = arith.constant 12 : index
    %c0_16 = arith.constant 0 : index
    %15 = vector.load %arg2[%c0_15, %c12, %c0_16] : memref<1x16x256xf32, #tpu.memory_space<vmem>>, vector<1x4x256xf32>
    %16 = vector.shape_cast %15 : vector<1x4x256xf32> to vector<4x256xf32>
    %c3 = arith.constant 3 : index
    %c0_17 = arith.constant 0 : index
    %c0_18 = arith.constant 0 : index
    %17 = vector.load %arg3[%c3, %c0_17, %c0_18] : memref<4x8x4xf32, #tpu.memory_space<vmem>>, vector<1x8x4xf32>
    %18 = vector.shape_cast %17 : vector<1x8x4xf32> to vector<8x4xf32>
    %cst_19 = arith.constant dense<0.000000e+00> : vector<8x256xf32>
    %19 = tpu.matmul %18, %16, %cst_19 {dimension_numbers = #tpu.dot_dimension_numbers<[1], [0], [0], [1], [0, 0, 1, 1], [], []>, precision = #tpu.contract_precision<fp32>} : vector<8x4xf32>, vector<4x256xf32>, vector<8x256xf32> -> vector<8x256xf32>
    %20 = arith.addf %4, %9 : vector<8x256xf32>
    %21 = arith.addf %20, %14 : vector<8x256xf32>
    %22 = arith.addf %21, %19 : vector<8x256xf32>
    %cst_20 = arith.constant 5.000000e-01 : f32
    %23 = vector.broadcast %cst_20 : f32 to vector<8x256xf32>
    %24 = arith.mulf %23, %22 : vector<8x256xf32>
    %25 = arith.mulf %24, %24 : vector<8x256xf32>
    %cst_21 = arith.constant dense<0.000000e+00> : vector<256xf32>
    %26 = vector.multi_reduction <add>, %25, %cst_21 [0] : vector<8x256xf32> to vector<256xf32>
    %27 = vector.shape_cast %26 : vector<256xf32> to vector<1x256xf32>
    %cst_22 = arith.constant 1.000000e-24 : f32
    %28 = vector.broadcast %cst_22 : f32 to vector<1x256xf32>
    %29 = arith.maximumf %27, %28 : vector<1x256xf32>
    %30 = math.rsqrt %29 : vector<1x256xf32>
    %31 = vector.broadcast %30 : vector<1x256xf32> to vector<8x256xf32>
    %32 = arith.mulf %24, %31 : vector<8x256xf32>
    %33 = arith.mulf %32, %4 : vector<8x256xf32>
    %cst_23 = arith.constant dense<0.000000e+00> : vector<256xf32>
    %34 = vector.multi_reduction <add>, %33, %cst_23 [0] : vector<8x256xf32> to vector<256xf32>
    %35 = vector.shape_cast %34 : vector<256xf32> to vector<1x256xf32>
    %36 = arith.mulf %32, %9 : vector<8x256xf32>
    %cst_24 = arith.constant dense<0.000000e+00> : vector<256xf32>
    %37 = vector.multi_reduction <add>, %36, %cst_24 [0] : vector<8x256xf32> to vector<256xf32>
    %38 = vector.shape_cast %37 : vector<256xf32> to vector<1x256xf32>
    %39 = arith.mulf %32, %14 : vector<8x256xf32>
    %cst_25 = arith.constant dense<0.000000e+00> : vector<256xf32>
    %40 = vector.multi_reduction <add>, %39, %cst_25 [0] : vector<8x256xf32> to vector<256xf32>
    %41 = vector.shape_cast %40 : vector<256xf32> to vector<1x256xf32>
    %42 = arith.mulf %32, %19 : vector<8x256xf32>
    %cst_26 = arith.constant dense<0.000000e+00> : vector<256xf32>
    %43 = vector.multi_reduction <add>, %42, %cst_26 [0] : vector<8x256xf32> to vector<256xf32>
    %44 = vector.shape_cast %43 : vector<256xf32> to vector<1x256xf32>
    %45 = arith.negf %35 : vector<1x256xf32>
    %46 = math.exp %45 : vector<1x256xf32>
    %cst_27 = arith.constant 1.000000e+00 : f32
    %47 = vector.broadcast %cst_27 : f32 to vector<1x256xf32>
    %48 = arith.addf %47, %46 : vector<1x256xf32>
    %49 = arith.divf %47, %48 : vector<1x256xf32>
    %50 = vector.broadcast %49 : vector<1x256xf32> to vector<8x256xf32>
    %51 = arith.mulf %50, %4 : vector<8x256xf32>
    %52 = arith.negf %38 : vector<1x256xf32>
    %53 = math.exp %52 : vector<1x256xf32>
    %cst_28 = arith.constant 1.000000e+00 : f32
    %54 = vector.broadcast %cst_28 : f32 to vector<1x256xf32>
    %55 = arith.addf %54, %53 : vector<1x256xf32>
    %56 = arith.divf %54, %55 : vector<1x256xf32>
    %57 = vector.broadcast %56 : vector<1x256xf32> to vector<8x256xf32>
    %58 = arith.mulf %57, %9 : vector<8x256xf32>
    %59 = arith.addf %51, %58 : vector<8x256xf32>
    %60 = arith.negf %41 : vector<1x256xf32>
    %61 = math.exp %60 : vector<1x256xf32>
    %cst_29 = arith.constant 1.000000e+00 : f32
    %62 = vector.broadcast %cst_29 : f32 to vector<1x256xf32>
    %63 = arith.addf %62, %61 : vector<1x256xf32>
    %64 = arith.divf %62, %63 : vector<1x256xf32>
    %65 = vector.broadcast %64 : vector<1x256xf32> to vector<8x256xf32>
    %66 = arith.mulf %65, %14 : vector<8x256xf32>
    %67 = arith.addf %59, %66 : vector<8x256xf32>
    %68 = arith.negf %44 : vector<1x256xf32>
    %69 = math.exp %68 : vector<1x256xf32>
    %cst_30 = arith.constant 1.000000e+00 : f32
    %70 = vector.broadcast %cst_30 : f32 to vector<1x256xf32>
    %71 = arith.addf %70, %69 : vector<1x256xf32>
    %72 = arith.divf %70, %71 : vector<1x256xf32>
    %73 = vector.broadcast %72 : vector<1x256xf32> to vector<8x256xf32>
    %74 = arith.mulf %73, %19 : vector<8x256xf32>
    %75 = arith.addf %67, %74 : vector<8x256xf32>
    %76 = arith.mulf %75, %75 : vector<8x256xf32>
    %cst_31 = arith.constant dense<0.000000e+00> : vector<256xf32>
    %77 = vector.multi_reduction <add>, %76, %cst_31 [0] : vector<8x256xf32> to vector<256xf32>
    %78 = vector.shape_cast %77 : vector<256xf32> to vector<1x256xf32>
    %cst_32 = arith.constant 1.000000e-24 : f32
    %79 = vector.broadcast %cst_32 : f32 to vector<1x256xf32>
    %80 = arith.maximumf %78, %79 : vector<1x256xf32>
    %81 = math.rsqrt %80 : vector<1x256xf32>
    %82 = vector.broadcast %81 : vector<1x256xf32> to vector<8x256xf32>
    %83 = arith.mulf %75, %82 : vector<8x256xf32>
    %84 = arith.mulf %83, %4 : vector<8x256xf32>
    %cst_33 = arith.constant dense<0.000000e+00> : vector<256xf32>
    %85 = vector.multi_reduction <add>, %84, %cst_33 [0] : vector<8x256xf32> to vector<256xf32>
    %86 = vector.shape_cast %85 : vector<256xf32> to vector<1x256xf32>
    %87 = arith.addf %35, %86 : vector<1x256xf32>
    %88 = arith.mulf %83, %9 : vector<8x256xf32>
    %cst_34 = arith.constant dense<0.000000e+00> : vector<256xf32>
    %89 = vector.multi_reduction <add>, %88, %cst_34 [0] : vector<8x256xf32> to vector<256xf32>
    %90 = vector.shape_cast %89 : vector<256xf32> to vector<1x256xf32>
    %91 = arith.addf %38, %90 : vector<1x256xf32>
    %92 = arith.mulf %83, %14 : vector<8x256xf32>
    %cst_35 = arith.constant dense<0.000000e+00> : vector<256xf32>
    %93 = vector.multi_reduction <add>, %92, %cst_35 [0] : vector<8x256xf32> to vector<256xf32>
    %94 = vector.shape_cast %93 : vector<256xf32> to vector<1x256xf32>
    %95 = arith.addf %41, %94 : vector<1x256xf32>
    %96 = arith.mulf %83, %19 : vector<8x256xf32>
    %cst_36 = arith.constant dense<0.000000e+00> : vector<256xf32>
    %97 = vector.multi_reduction <add>, %96, %cst_36 [0] : vector<8x256xf32> to vector<256xf32>
    %98 = vector.shape_cast %97 : vector<256xf32> to vector<1x256xf32>
    %99 = arith.addf %44, %98 : vector<1x256xf32>
    %100 = arith.negf %87 : vector<1x256xf32>
    %101 = math.exp %100 : vector<1x256xf32>
    %cst_37 = arith.constant 1.000000e+00 : f32
    %102 = vector.broadcast %cst_37 : f32 to vector<1x256xf32>
    %103 = arith.addf %102, %101 : vector<1x256xf32>
    %104 = arith.divf %102, %103 : vector<1x256xf32>
    %105 = vector.broadcast %104 : vector<1x256xf32> to vector<8x256xf32>
    %106 = arith.mulf %105, %4 : vector<8x256xf32>
    %107 = arith.negf %91 : vector<1x256xf32>
    %108 = math.exp %107 : vector<1x256xf32>
    %cst_38 = arith.constant 1.000000e+00 : f32
    %109 = vector.broadcast %cst_38 : f32 to vector<1x256xf32>
    %110 = arith.addf %109, %108 : vector<1x256xf32>
    %111 = arith.divf %109, %110 : vector<1x256xf32>
    %112 = vector.broadcast %111 : vector<1x256xf32> to vector<8x256xf32>
    %113 = arith.mulf %112, %9 : vector<8x256xf32>
    %114 = arith.addf %106, %113 : vector<8x256xf32>
    %115 = arith.negf %95 : vector<1x256xf32>
    %116 = math.exp %115 : vector<1x256xf32>
    %cst_39 = arith.constant 1.000000e+00 : f32
    %117 = vector.broadcast %cst_39 : f32 to vector<1x256xf32>
    %118 = arith.addf %117, %116 : vector<1x256xf32>
    %119 = arith.divf %117, %118 : vector<1x256xf32>
    %120 = vector.broadcast %119 : vector<1x256xf32> to vector<8x256xf32>
    %121 = arith.mulf %120, %14 : vector<8x256xf32>
    %122 = arith.addf %114, %121 : vector<8x256xf32>
    %123 = arith.negf %99 : vector<1x256xf32>
    %124 = math.exp %123 : vector<1x256xf32>
    %cst_40 = arith.constant 1.000000e+00 : f32
    %125 = vector.broadcast %cst_40 : f32 to vector<1x256xf32>
    %126 = arith.addf %125, %124 : vector<1x256xf32>
    %127 = arith.divf %125, %126 : vector<1x256xf32>
    %128 = vector.broadcast %127 : vector<1x256xf32> to vector<8x256xf32>
    %129 = arith.mulf %128, %19 : vector<8x256xf32>
    %130 = arith.addf %122, %129 : vector<8x256xf32>
    %c0_41 = arith.constant 0 : index
    %c0_42 = arith.constant 0 : index
    %131 = vector.load %arg4[%c0_41, %c0_42] : memref<8x1xf32, #tpu.memory_space<vmem>>, vector<8x1xf32>
    %132 = vector.broadcast %131 : vector<8x1xf32> to vector<8x256xf32>
    %133 = arith.addf %130, %132 : vector<8x256xf32>
    %c0_43 = arith.constant 0 : index
    %c0_44 = arith.constant 0 : index
    %c0_45 = arith.constant 0 : index
    %134 = vector.load %arg5[%c0_43, %c0_44, %c0_45] : memref<1x8x256xf32, #tpu.memory_space<vmem>>, vector<1x8x256xf32>
    %135 = vector.shape_cast %134 : vector<1x8x256xf32> to vector<8x256xf32>
    %136 = vector.shape_cast %133 : vector<8x256xf32> to vector<1x8x256xf32>
    tpu.vector_store %arg5[%c0_43, %c0_44, %c0_45], %136 {strides = array<i32>} : memref<1x8x256xf32, #tpu.memory_space<vmem>>, vector<1x8x256xf32>,
    return
  }
  func.func @transform_0(%arg0: i32, %arg1: i32) -> (i32, i32, i32) {
    %c0_i32 = arith.constant 0 : i32
    %c0_i32_0 = arith.constant 0 : i32
    return %arg0, %c0_i32, %arg1 : i32, i32, i32
  }
  func.func @transform_1(%arg0: i32, %arg1: i32) -> (i32, i32, i32) {
    %c0_i32 = arith.constant 0 : i32
    %c0_i32_0 = arith.constant 0 : i32
    %c0_i32_1 = arith.constant 0 : i32
    %c0_i32_2 = arith.constant 0 : i32
    return %c0_i32, %c0_i32_0, %c0_i32_1 : i32, i32, i32
  }
  func.func @transform_2(%arg0: i32, %arg1: i32) -> (i32, i32) {
    %c0_i32 = arith.constant 0 : i32
    %c0_i32_0 = arith.constant 0 : i32
    %c0_i32_1 = arith.constant 0 : i32
    return %c0_i32, %c0_i32_0 : i32, i32
  }
  func.func @transform_3(%arg0: i32, %arg1: i32) -> (i32, i32, i32) {
    %c0_i32 = arith.constant 0 : i32
    %c0_i32_0 = arith.constant 0 : i32
    return %arg0, %c0_i32, %arg1 : i32, i32, i32
  }
}

</mosaic_0001>

<llo_original>
// kernel: tpu_custom_call.1
$region0: #{tpu_custom_call.1}
  #allocation0 [shape = 'u32[]', space=smem, size = 0x4, offset = 0x4, fixed_abs, tag = 'smem constant byte address 0x4 - core index']
  #allocation1 [shape = 'u32[72,128]{1,0:T(1,128)}', space=vmem, size = 0x9000, scoped, tag = 'internal scratch']
  %s0 = inlined_call_operand.hbm [shape: f32[2,16,256], index: 0, kind: input, shape index: {}]
  %s1 = inlined_call_operand.vmem [shape: f32[4,8,4], index: 1, kind: input, shape index: {}]
  %s2 = inlined_call_operand.vmem [shape: f32[8,1], index: 2, kind: input, shape index: {}]
  %s3 = inlined_call_operand.hbm [shape: f32[2,8,256], index: 3, kind: output, shape index: {}]
  %s4 = sld [smem:[#allocation0]]
  $region49: #{tpu_custom_call.1} parent=0
    _
  %s6 = ssub.s32 1, %s4
  %s7 = scalar_select 0, %s6, %s4
  $region1: #{tpu_custom_call.1} parent=0
    #allocation2 [shape = 'u8[32768]{0}', space=vmem, size = 0x8000, scoped, tag = 'input window, operand 0']
    #allocation3 [shape = 's32[2]{0}', space=sflag, size = 0x8, scoped, tag = 'scoped memory for tpu_custom_call.1']
    #allocation4 [shape = 's32[2]{0}', space=sflag, size = 0x8, scoped, tag = 'scoped memory for tpu_custom_call.1']
    #allocation5 [shape = 'u8[16384]{0}', space=vmem, size = 0x4000, scoped, tag = 'output window, operand 0']
    %8 = vsyncpa [#allocation3], 0
    %s9 = scalar_lea.sflag [#allocation3], 1
    %10 = vsyncpa %s9, 0
    %11 = vsyncpa [#allocation4], 0
    %s12 = scalar_lea.sflag [#allocation4], 1
    %13 = vsyncpa %s12, 0
    loop: start=0, step=1, limit=4
    $region2: #{tpu_custom_call.1} parent=1 // loop_pre_header
      _
    $region3: #{tpu_custom_call.1} parent=1 // loop_header
      %s15 = sphi 0, %s19
      %p16 = scmp.ge.s32.totalorder %s15, 4
      %s22 = sphi 0, %s34
      %s23 = sphi 0, %s30
      %s24 = sphi 0, %s22
      %s25 = sphi 0, %s23
      %s26 = sphi 0, %s24
      %s27 = sphi 0, %s25
      %s39 = sphi 0, %s41
      %s42 = sphi 0, %s39
      %s43 = sphi 0, %s42
      %s59 = sphi 0, %s43
      %s63 = sphi 0, %s63
      %s65 = sphi 0, %s63
      %s66 = sphi 0, %s65
      %s80 = sphi 0, %s66
      %s84 = sphi 0, %s84
      %s86 = sphi 0, %s84
      %s87 = sphi 0, %s86
      %s101 = sphi 0, %s87
      %s109 = sphi 0, %s111
      %s112 = sphi 0, %s109
      %s113 = sphi 0, %s112
      %s129 = sphi 0, %s113
    $region4: #{tpu_custom_call.1} parent=1 // loop_header_branch
      %18 = sbr.rel (%p16) target = $region8
    $region5: #{tpu_custom_call.1} parent=1 // loop_body
      %s20 = ssub.s32 %s15, 1
      %s21 = ssub.s32 %s15, 2
      %s28 = sadd.s32 1, %s23
      %p29 = scmp.ge.s32.totalorder %s28, 1
      %s30 = scalar_select %p29, 0, %s28
      %s31 = sadd.s32 1, %s22
      %s32 = scalar_select %p29, %s31, %s22
      %p33 = scmp.ge.s32.totalorder %s32, 2
      %s34 = scalar_select %p33, 0, %s32
      %s35 = ssub.s32 %s22, %s34
      %s36 = ssub.s32 %s23, %s30
      %s37 = sor.u32 %s35, %s36
      %p38 = scmp.eq.s32.totalorder %s37, 0
      %s40 = sadd.s32 %s39, 1
      %s41 = scalar_select %p38, %s39, %s40
      %p44 = pneg %p38
      %p45 = scmp.eq.s32.totalorder %s15, 1
      %p46 = por %p44, %p45
      %p47 = scmp.ne.s32.totalorder %s39, %s42
      %p48 = scmp.eq.s32.totalorder %s15, 0
      %p49 = por %p47, %p48
      %p50 = scmp.ne.s32.totalorder %s39, %s42
      %p51 = scmp.eq.s32.totalorder %s20, 1
      %p52 = por %p50, %p51
      %p53 = scmp.ne.s32.totalorder %s42, %s43
      %p54 = scmp.eq.s32.totalorder %s20, 0
      %p55 = por %p53, %p54
      %p56 = scmp.ne.s32.totalorder %s42, %s43
      %p57 = scmp.eq.s32.totalorder %s21, 1
      %p58 = por %p56, %p57
      %p60 = scmp.ne.s32.totalorder %s43, %s59
      %p61 = scmp.eq.s32.totalorder %s21, 0
      %p62 = por %p60, %p61
      %s64 = sadd.s32 %s63, 1
      %p67 = scmp.eq.s32.totalorder %s15, 1
      %p68 = scmp.ne.s32.totalorder %s63, %s65
      %p69 = scmp.eq.s32.totalorder %s15, 0
      %p70 = por %p68, %p69
      %p71 = scmp.ne.s32.totalorder %s63, %s65
      %p72 = scmp.eq.s32.totalorder %s20, 1
      %p73 = por %p71, %p72
      %p74 = scmp.ne.s32.totalorder %s65, %s66
      %p75 = scmp.eq.s32.totalorder %s20, 0
      %p76 = por %p74, %p75
      %p77 = scmp.ne.s32.totalorder %s65, %s66
      %p78 = scmp.eq.s32.totalorder %s21, 1
      %p79 = por %p77, %p78
      %p81 = scmp.ne.s32.totalorder %s66, %s80
      %p82 = scmp.eq.s32.totalorder %s21, 0
      %p83 = por %p81, %p82
      %s85 = sadd.s32 %s84, 1
      %p88 = scmp.eq.s32.totalorder %s15, 1
      %p89 = scmp.ne.s32.totalorder %s84, %s86
      %p90 = scmp.eq.s32.totalorder %s15, 0
      %p91 = por %p89, %p90
      %p92 = scmp.ne.s32.totalorder %s84, %s86
      %p93 = scmp.eq.s32.totalorder %s20, 1
      %p94 = por %p92, %p93
      %p95 = scmp.ne.s32.totalorder %s86, %s87
      %p96 = scmp.eq.s32.totalorder %s20, 0
      %p97 = por %p95, %p96
      %p98 = scmp.ne.s32.totalorder %s86, %s87
      %p99 = scmp.eq.s32.totalorder %s21, 1
      %p100 = por %p98, %p99
      %p102 = scmp.ne.s32.totalorder %s87, %s101
      %p103 = scmp.eq.s32.totalorder %s21, 0
      %p104 = por %p102, %p103
      %s105 = ssub.s32 %s22, %s34
      %s106 = ssub.s32 %s23, %s30
      %s107 = sor.u32 %s105, %s106
      %p108 = scmp.eq.s32.totalorder %s107, 0
      %s110 = sadd.s32 %s109, 1
      %s111 = scalar_select %p108, %s109, %s110
      %p114 = pneg %p108
      %p115 = scmp.eq.s32.totalorder %s15, 1
      %p116 = por %p114, %p115
      %p117 = scmp.ne.s32.totalorder %s109, %s112
      %p118 = scmp.eq.s32.totalorder %s15, 0
      %p119 = por %p117, %p118
      %p120 = scmp.ne.s32.totalorder %s109, %s112
      %p121 = scmp.eq.s32.totalorder %s20, 1
      %p122 = por %p120, %p121
      %p123 = scmp.ne.s32.totalorder %s112, %s113
      %p124 = scmp.eq.s32.totalorder %s20, 0
      %p125 = por %p123, %p124
      %p126 = scmp.ne.s32.totalorder %s112, %s113
      %p127 = scmp.eq.s32.totalorder %s21, 1
      %p128 = por %p126, %p127
      %p130 = scmp.ne.s32.totalorder %s113, %s129
      %p131 = scmp.eq.s32.totalorder %s21, 0
      %p132 = por %p130, %p131
      %p133 = scmp.le.s32.totalorder 1, %s15
      %p134 = scmp.lt.s32.totalorder %s15, 3
      %p135 = pnand %p133, %p134
      %p136 = pneg %p135
      // Predicated region
      $region9: #{tpu_custom_call.1} parent=5 // pred_check
        _
      $region10: #{tpu_custom_call.1} parent=5 // pred_check_branch
        %138 = sbr.rel (%p135) target = $region12
      $region11: #{tpu_custom_call.1} parent=5 // pred_region
        %s139 = ssub.s32 %s15, 1
        // Predicated region
        $region13: #{tpu_custom_call.1} parent=11 // pred_check
          %p140 = pneg %p76
        $region14: #{tpu_custom_call.1} parent=11 // pred_check_branch
          %142 = sbr.rel (%p140) target = $region16
        $region15: #{tpu_custom_call.1} parent=11 // pred_region
          _
        $region16: #{tpu_custom_call.1} parent=11 // pred_fallthru
          _
        // Predicated region
        $region17: #{tpu_custom_call.1} parent=11 // pred_check
          %p143 = pneg %p97
        $region18: #{tpu_custom_call.1} parent=11 // pred_check_branch
          %145 = sbr.rel (%p143) target = $region20
        $region19: #{tpu_custom_call.1} parent=11 // pred_region
          _
        $region20: #{tpu_custom_call.1} parent=11 // pred_fallthru
          _
      $region12: #{tpu_custom_call.1} parent=5 // pred_fallthru
        _
      %p146 = scmp.lt.s32.totalorder %s15, 2
      // Predicated region
      $region21: #{tpu_custom_call.1} parent=5 // pred_check
        %p147 = pneg %p146
      $region22: #{tpu_custom_call.1} parent=5 // pred_check_branch
        %149 = sbr.rel (%p147) target = $region24
      $region23: #{tpu_custom_call.1} parent=5 // pred_region
        // Predicated region
        $region25: #{tpu_custom_call.1} parent=23 // pred_check
          %p150 = pneg %p49
        $region26: #{tpu_custom_call.1} parent=23 // pred_check_branch
          %152 = sbr.rel (%p150) target = $region28
        $region27: #{tpu_custom_call.1} parent=23 // pred_region
          %s153 = sand.u32 %s39, 1
          %s154 = scalar_lea.sflag [#allocation3], %s153
          %s155 = sand.u32 %s39, 1
          %s156 = smul.addr %s155, 32
          %s157 = scalar_lea.vmem [#allocation2], %s156
          %s158 = smul.u32 2, %s23
          %160 = vsyncadd %s154, 0
          %s161 = smul.addr %s22, 4
          %s162 = sadd.s32 %s158, %s161
          %s163 = smul.addr %s162, 8
          %s164 = scalar_lea.hbm %s0, %s163
          %s165 = sshll.u32 %s164, 4
          %s166 = int_to_ptr.hbm [resolvable:$true] %s165
          %s167 = sshll.u32 %s157, 4
          %s168 = int_to_ptr.vmem [resolvable:$true] %s167
          %173 = dma.hbm_to_vmem [thread:$0]  %s166, 512, %s168, %s154, 256, 256, 16
        $region28: #{tpu_custom_call.1} parent=23 // pred_fallthru
          _
      $region24: #{tpu_custom_call.1} parent=5 // pred_fallthru
        _
      %p174 = scmp.le.s32.totalorder 1, %s15
      %p175 = scmp.lt.s32.totalorder %s15, 3
      %p176 = pnand %p174, %p175
      %p177 = pneg %p176
      // Predicated region
      $region29: #{tpu_custom_call.1} parent=5 // pred_check
        _
      $region30: #{tpu_custom_call.1} parent=5 // pred_check_branch
        %179 = sbr.rel (%p176) target = $region32
      $region31: #{tpu_custom_call.1} parent=5 // pred_region
        %s180 = ssub.s32 %s15, 1
        %s181 = sand.u32 %s42, 1
        %s182 = scalar_lea.sflag [#allocation3], %s181
        %s183 = sand.u32 %s42, 1
        %s184 = smul.addr %s183, 32
        %s185 = scalar_lea.vmem [#allocation2], %s184
        // Predicated region
        $region33: #{tpu_custom_call.1} parent=31 // pred_check
          %p186 = pneg %p55
        $region34: #{tpu_custom_call.1} parent=31 // pred_check_branch
          %188 = sbr.rel (%p186) target = $region36
        $region35: #{tpu_custom_call.1} parent=31 // pred_region
          %190 = dma.done %s182, 512
        $region36: #{tpu_custom_call.1} parent=31 // pred_fallthru
          _
        %s191 = sand.u32 %s42, 1
        %s192 = scalar_lea.sflag [#allocation3], %s191
        %s193 = sand.u32 %s42, 1
        %s194 = smul.addr %s193, 32
        %s195 = scalar_lea.vmem [#allocation2], %s194
        %p196 = pneg %p55
        %p197 = pneg %p52
        %p198 = pneg %p76
        %p199 = pneg %p73
        %p200 = pneg %p97
        %p201 = pneg %p94
        %p202 = pneg %p125
        %p203 = pneg %p122
        %s204 = sand.u32 %s112, 1
        %s205 = scalar_lea.sflag [#allocation4], %s204
        %s206 = sand.u32 %s112, 1
        %s207 = smul.addr %s206, 16
        %s208 = scalar_lea.vmem [#allocation5], %s207
        %s209 = smul.u32 2, %s25
        %s210 = smul.u32 2, %s25
        %v211 = vld [vmem:[%s185] sm:$0xf]
        %v212 = vld [vmem:[%s185 + $0x8] sm:$0xf]
        %v213 = vld [vmem:[%s1] sm:$0xff]
        %vm214 = vcmask 31744
        %v216 = vsel %vm214, %v213, 0
        %vm218 = vcmask 1043456
        %v220 = vsel %vm218, %v211, 0
        %v223 = vsel %vm218, %v212, 0
        %225 = vmatpush.msra.mxu0 0.0
        %226 = vmatpush.msra.mxu0 0.0
        %227 = vmatpush.msra.mxu0 0.0
        %228 = vmatpush.msra.mxu0 0.0
        %229 = vmatpush.msra.mxu0 0.0
        %230 = vmatpush.msra.mxu0 0.0
        %231 = vmatpush.msra.mxu0 0.0
        %232 = vmatpush.msra.mxu0 0.0
        %233 = vmatpush.msra.mxu0 0.0
        %234 = vmatpush.msra.mxu0 0.0
        %235 = vmatpush.msra.mxu0 0.0
        %236 = vmatpush.msra.mxu0 0.0
        %237 = vmatpush.msra.mxu0 0.0
        %238 = vmatpush.msra.mxu0 0.0
        %239 = vmatpush.msra.mxu0 0.0
        %v240 = vand.u32 %v220, 4294901760
        %241 = vmatpush.msra.mxu0 %v240
        %v242 = vand.u32 %v216, 4294901760
        %v243 = vsub.f32 %v216, %v242
        %v244 = vand.u32 %v243, 4294901760
        %v245 = vsub.f32 %v243, %v244
        %v246 = vand.u32 %v245, 4294901760
        %247 = vmatmul.f32.gmra.mxu0 %v246
        %v248 = vpop.f32.mrf.mxu0
        %v249 = vadd.f32 0.0, %v248
        %250 = vdwg.mxu0
        %251 = vmatpush.msra.mxu0 0.0
        %252 = vmatpush.msra.mxu0 0.0
        %253 = vmatpush.msra.mxu0 0.0
        %254 = vmatpush.msra.mxu0 0.0
        %255 = vmatpush.msra.mxu0 0.0
        %256 = vmatpush.msra.mxu0 0.0
        %257 = vmatpush.msra.mxu0 0.0
        %258 = vmatpush.msra.mxu0 0.0
        %259 = vmatpush.msra.mxu0 0.0
        %260 = vmatpush.msra.mxu0 0.0
        %261 = vmatpush.msra.mxu0 0.0
        %262 = vmatpush.msra.mxu0 0.0
        %263 = vmatpush.msra.mxu0 0.0
        %264 = vmatpush.msra.mxu0 0.0
        %265 = vmatpush.msra.mxu0 0.0
        %v266 = vand.u32 %v220, 4294901760
        %v267 = vsub.f32 %v220, %v266
        %v268 = vand.u32 %v267, 4294901760
        %v269 = vsub.f32 %v267, %v268
        %v270 = vand.u32 %v269, 4294901760
        %271 = vmatpush.msra.mxu0 %v270
        %v272 = vand.u32 %v216, 4294901760
        %273 = vmatmul.f32.gmra.mxu0 %v272
        %v274 = vpop.f32.mrf.mxu0
        %v275 = vadd.f32 %v249, %v274
        %276 = vdwg.mxu0
        %277 = vmatpush.msra.mxu0 0.0
        %278 = vmatpush.msra.mxu0 0.0
        %279 = vmatpush.msra.mxu0 0.0
        %280 = vmatpush.msra.mxu0 0.0
        %281 = vmatpush.msra.mxu0 0.0
        %282 = vmatpush.msra.mxu0 0.0
        %283 = vmatpush.msra.mxu0 0.0
        %284 = vmatpush.msra.mxu0 0.0
        %285 = vmatpush.msra.mxu0 0.0
        %286 = vmatpush.msra.mxu0 0.0
        %287 = vmatpush.msra.mxu0 0.0
        %288 = vmatpush.msra.mxu0 0.0
        %289 = vmatpush.msra.mxu0 0.0
        %290 = vmatpush.msra.mxu0 0.0
        %291 = vmatpush.msra.mxu0 0.0
        %v292 = vand.u32 %v220, 4294901760
        %v293 = vsub.f32 %v220, %v292
        %294 = vmatpush.msra.mxu0 %v293
        %v295 = vand.u32 %v216, 4294901760
        %v296 = vsub.f32 %v216, %v295
        %297 = vmatmul.f32.gmra.mxu0 %v296
        %v298 = vpop.f32.mrf.mxu0
        %v299 = vadd.f32 %v275, %v298
        %300 = vdwg.mxu0
        %301 = vmatpush.msra.mxu0 0.0
        %302 = vmatpush.msra.mxu0 0.0
        %303 = vmatpush.msra.mxu0 0.0
        %304 = vmatpush.msra.mxu0 0.0
        %305 = vmatpush.msra.mxu0 0.0
        %306 = vmatpush.msra.mxu0 0.0
        %307 = vmatpush.msra.mxu0 0.0
        %308 = vmatpush.msra.mxu0 0.0
        %309 = vmatpush.msra.mxu0 0.0
        %310 = vmatpush.msra.mxu0 0.0
        %311 = vmatpush.msra.mxu0 0.0
        %312 = vmatpush.msra.mxu0 0.0
        %313 = vmatpush.msra.mxu0 0.0
        %314 = vmatpush.msra.mxu0 0.0
        %315 = vmatpush.msra.mxu0 0.0
        %v316 = vand.u32 %v220, 4294901760
        %317 = vmatpush.msra.mxu0 %v316
        %v318 = vand.u32 %v216, 4294901760
        %v319 = vsub.f32 %v216, %v318
        %v320 = vand.u32 %v319, 4294901760
        %321 = vmatmul.f32.gmra.mxu0 %v320
        %v322 = vpop.f32.mrf.mxu0
        %v323 = vadd.f32 %v299, %v322
        %324 = vdwg.mxu0
        %325 = vmatpush.msra.mxu0 0.0
        %326 = vmatpush.msra.mxu0 0.0
        %327 = vmatpush.msra.mxu0 0.0
        %328 = vmatpush.msra.mxu0 0.0
        %329 = vmatpush.msra.mxu0 0.0
        %330 = vmatpush.msra.mxu0 0.0
        %331 = vmatpush.msra.mxu0 0.0
        %332 = vmatpush.msra.mxu0 0.0
        %333 = vmatpush.msra.mxu0 0.0
        %334 = vmatpush.msra.mxu0 0.0
        %335 = vmatpush.msra.mxu0 0.0
        %336 = vmatpush.msra.mxu0 0.0
        %337 = vmatpush.msra.mxu0 0.0
        %338 = vmatpush.msra.mxu0 0.0
        %339 = vmatpush.msra.mxu0 0.0
        %v340 = vand.u32 %v220, 4294901760
        %v341 = vsub.f32 %v220, %v340
        %v342 = vand.u32 %v341, 4294901760
        %343 = vmatpush.msra.mxu0 %v342
        %v344 = vand.u32 %v216, 4294901760
        %345 = vmatmul.f32.gmra.mxu0 %v344
        %v346 = vpop.f32.mrf.mxu0
        %v347 = vadd.f32 %v323, %v346
        %348 = vdwg.mxu0
        %349 = vmatpush.msra.mxu0 0.0
        %350 = vmatpush.msra.mxu0 0.0
        %351 = vmatpush.msra.mxu0 0.0
        %352 = vmatpush.msra.mxu0 0.0
        %353 = vmatpush.msra.mxu0 0.0
        %354 = vmatpush.msra.mxu0 0.0
        %355 = vmatpush.msra.mxu0 0.0
        %356 = vmatpush.msra.mxu0 0.0
        %357 = vmatpush.msra.mxu0 0.0
        %358 = vmatpush.msra.mxu0 0.0
        %359 = vmatpush.msra.mxu0 0.0
        %360 = vmatpush.msra.mxu0 0.0
        %361 = vmatpush.msra.mxu0 0.0
        %362 = vmatpush.msra.mxu0 0.0
        %363 = vmatpush.msra.mxu0 0.0
        %v364 = vand.u32 %v220, 4294901760
        %365 = vmatpush.msra.mxu0 %v364
        %v366 = vand.u32 %v216, 4294901760
        %367 = vmatmul.f32.gmra.mxu0 %v366
        %v368 = vpop.f32.mrf.mxu0
        %v369 = vadd.f32 %v347, %v368
        %370 = vdwg.mxu0
        %371 = vmatpush.msra.mxu0 0.0
        %372 = vmatpush.msra.mxu0 0.0
        %373 = vmatpush.msra.mxu0 0.0
        %374 = vmatpush.msra.mxu0 0.0
        %375 = vmatpush.msra.mxu0 0.0
        %376 = vmatpush.msra.mxu0 0.0
        %377 = vmatpush.msra.mxu0 0.0
        %378 = vmatpush.msra.mxu0 0.0
        %379 = vmatpush.msra.mxu0 0.0
        %380 = vmatpush.msra.mxu0 0.0
        %381 = vmatpush.msra.mxu0 0.0
        %382 = vmatpush.msra.mxu0 0.0
        %383 = vmatpush.msra.mxu0 0.0
        %384 = vmatpush.msra.mxu0 0.0
        %385 = vmatpush.msra.mxu0 0.0
        %v386 = vand.u32 %v223, 4294901760
        %387 = vmatpush.msra.mxu0 %v386
        %v388 = vand.u32 %v216, 4294901760
        %v389 = vsub.f32 %v216, %v388
        %v390 = vand.u32 %v389, 4294901760
        %v391 = vsub.f32 %v389, %v390
        %v392 = vand.u32 %v391, 4294901760
        %393 = vmatmul.f32.gmra.mxu0 %v392
        %v394 = vpop.f32.mrf.mxu0
        %v395 = vadd.f32 0.0, %v394
        %396 = vdwg.mxu0
        %397 = vmatpush.msra.mxu0 0.0
        %398 = vmatpush.msra.mxu0 0.0
        %399 = vmatpush.msra.mxu0 0.0
        %400 = vmatpush.msra.mxu0 0.0
        %401 = vmatpush.msra.mxu0 0.0
        %402 = vmatpush.msra.mxu0 0.0
        %403 = vmatpush.msra.mxu0 0.0
        %404 = vmatpush.msra.mxu0 0.0
        %405 = vmatpush.msra.mxu0 0.0
        %406 = vmatpush.msra.mxu0 0.0
        %407 = vmatpush.msra.mxu0 0.0
        %408 = vmatpush.msra.mxu0 0.0
        %409 = vmatpush.msra.mxu0 0.0
        %410 = vmatpush.msra.mxu0 0.0
        %411 = vmatpush.msra.mxu0 0.0
        %v412 = vand.u32 %v223, 4294901760
        %v413 = vsub.f32 %v223, %v412
        %v414 = vand.u32 %v413, 4294901760
        %v415 = vsub.f32 %v413, %v414
        %v416 = vand.u32 %v415, 4294901760
        %417 = vmatpush.msra.mxu0 %v416
        %v418 = vand.u32 %v216, 4294901760
        %419 = vmatmul.f32.gmra.mxu0 %v418
        %v420 = vpop.f32.mrf.mxu0
        %v421 = vadd.f32 %v395, %v420
        %422 = vdwg.mxu0
        %423 = vmatpush.msra.mxu0 0.0
        %424 = vmatpush.msra.mxu0 0.0
        %425 = vmatpush.msra.mxu0 0.0
        %426 = vmatpush.msra.mxu0 0.0
        %427 = vmatpush.msra.mxu0 0.0
        %428 = vmatpush.msra.mxu0 0.0
        %429 = vmatpush.msra.mxu0 0.0
        %430 = vmatpush.msra.mxu0 0.0
        %431 = vmatpush.msra.mxu0 0.0
        %432 = vmatpush.msra.mxu0 0.0
        %433 = vmatpush.msra.mxu0 0.0
        %434 = vmatpush.msra.mxu0 0.0
        %435 = vmatpush.msra.mxu0 0.0
        %436 = vmatpush.msra.mxu0 0.0
        %437 = vmatpush.msra.mxu0 0.0
        %v438 = vand.u32 %v223, 4294901760
        %v439 = vsub.f32 %v223, %v438
        %440 = vmatpush.msra.mxu0 %v439
        %v441 = vand.u32 %v216, 4294901760
        %v442 = vsub.f32 %v216, %v441
        %443 = vmatmul.f32.gmra.mxu0 %v442
        %v444 = vpop.f32.mrf.mxu0
        %v445 = vadd.f32 %v421, %v444
        %446 = vdwg.mxu0
        %447 = vmatpush.msra.mxu0 0.0
        %448 = vmatpush.msra.mxu0 0.0
        %449 = vmatpush.msra.mxu0 0.0
        %450 = vmatpush.msra.mxu0 0.0
        %451 = vmatpush.msra.mxu0 0.0
        %452 = vmatpush.msra.mxu0 0.0
        %453 = vmatpush.msra.mxu0 0.0
        %454 = vmatpush.msra.mxu0 0.0
        %455 = vmatpush.msra.mxu0 0.0
        %456 = vmatpush.msra.mxu0 0.0
        %457 = vmatpush.msra.mxu0 0.0
        %458 = vmatpush.msra.mxu0 0.0
        %459 = vmatpush.msra.mxu0 0.0
        %460 = vmatpush.msra.mxu0 0.0
        %461 = vmatpush.msra.mxu0 0.0
        %v462 = vand.u32 %v223, 4294901760
        %463 = vmatpush.msra.mxu0 %v462
        %v464 = vand.u32 %v216, 4294901760
        %v465 = vsub.f32 %v216, %v464
        %v466 = vand.u32 %v465, 4294901760
        %467 = vmatmul.f32.gmra.mxu0 %v466
        %v468 = vpop.f32.mrf.mxu0
        %v469 = vadd.f32 %v445, %v468
        %470 = vdwg.mxu0
        %471 = vmatpush.msra.mxu0 0.0
        %472 = vmatpush.msra.mxu0 0.0
        %473 = vmatpush.msra.mxu0 0.0
        %474 = vmatpush.msra.mxu0 0.0
        %475 = vmatpush.msra.mxu0 0.0
        %476 = vmatpush.msra.mxu0 0.0
        %477 = vmatpush.msra.mxu0 0.0
        %478 = vmatpush.msra.mxu0 0.0
        %479 = vmatpush.msra.mxu0 0.0
        %480 = vmatpush.msra.mxu0 0.0
        %481 = vmatpush.msra.mxu0 0.0
        %482 = vmatpush.msra.mxu0 0.0
        %483 = vmatpush.msra.mxu0 0.0
        %484 = vmatpush.msra.mxu0 0.0
        %485 = vmatpush.msra.mxu0 0.0
        %v486 = vand.u32 %v223, 4294901760
        %v487 = vsub.f32 %v223, %v486
        %v488 = vand.u32 %v487, 4294901760
        %489 = vmatpush.msra.mxu0 %v488
        %v490 = vand.u32 %v216, 4294901760
        %491 = vmatmul.f32.gmra.mxu0 %v490
        %v492 = vpop.f32.mrf.mxu0
        %v493 = vadd.f32 %v469, %v492
        %494 = vdwg.mxu0
        %495 = vmatpush.msra.mxu0 0.0
        %496 = vmatpush.msra.mxu0 0.0
        %497 = vmatpush.msra.mxu0 0.0
        %498 = vmatpush.msra.mxu0 0.0
        %499 = vmatpush.msra.mxu0 0.0
        %500 = vmatpush.msra.mxu0 0.0
        %501 = vmatpush.msra.mxu0 0.0
        %502 = vmatpush.msra.mxu0 0.0
        %503 = vmatpush.msra.mxu0 0.0
        %504 = vmatpush.msra.mxu0 0.0
        %505 = vmatpush.msra.mxu0 0.0
        %506 = vmatpush.msra.mxu0 0.0
        %507 = vmatpush.msra.mxu0 0.0
        %508 = vmatpush.msra.mxu0 0.0
        %509 = vmatpush.msra.mxu0 0.0
        %v510 = vand.u32 %v223, 4294901760
        %511 = vmatpush.msra.mxu0 %v510
        %v512 = vand.u32 %v216, 4294901760
        %513 = vmatmul.f32.gmra.mxu0 %v512
        %v514 = vpop.f32.mrf.mxu0
        %v515 = vadd.f32 %v493, %v514
        %516 = vdwg.mxu0
        %v517 = vld [vmem:[%s185] sm:$0xf0]
        %v518 = vld [vmem:[%s185 + $0x8] sm:$0xf0]
        %s519 = scalar_lea.vmem %s1, 8
        %v520 = vld [vmem:[%s519] sm:$0xff]
        %v523 = vrot.slane %v517, 4
        %v524 = vrot.slane %v518, 4
        %v526 = vsel %vm214, %v520, 0
        %v528 = vsel %vm218, %v523, 0
        %v530 = vsel %vm218, %v524, 0
        %532 = vmatpush.msra.mxu0 0.0
        %533 = vmatpush.msra.mxu0 0.0
        %534 = vmatpush.msra.mxu0 0.0
        %535 = vmatpush.msra.mxu0 0.0
        %536 = vmatpush.msra.mxu0 0.0
        %537 = vmatpush.msra.mxu0 0.0
        %538 = vmatpush.msra.mxu0 0.0
        %539 = vmatpush.msra.mxu0 0.0
        %540 = vmatpush.msra.mxu0 0.0
        %541 = vmatpush.msra.mxu0 0.0
        %542 = vmatpush.msra.mxu0 0.0
        %543 = vmatpush.msra.mxu0 0.0
        %544 = vmatpush.msra.mxu0 0.0
        %545 = vmatpush.msra.mxu0 0.0
        %546 = vmatpush.msra.mxu0 0.0
        %v547 = vand.u32 %v528, 4294901760
        %548 = vmatpush.msra.mxu0 %v547
        %v549 = vand.u32 %v526, 4294901760
        %v550 = vsub.f32 %v526, %v549
        %v551 = vand.u32 %v550, 4294901760
        %v552 = vsub.f32 %v550, %v551
        %v553 = vand.u32 %v552, 4294901760
        %554 = vmatmul.f32.gmra.mxu0 %v553
        %v555 = vpop.f32.mrf.mxu0
        %v556 = vadd.f32 0.0, %v555
        %557 = vdwg.mxu0
        %558 = vmatpush.msra.mxu0 0.0
        %559 = vmatpush.msra.mxu0 0.0
        %560 = vmatpush.msra.mxu0 0.0
        %561 = vmatpush.msra.mxu0 0.0
        %562 = vmatpush.msra.mxu0 0.0
        %563 = vmatpush.msra.mxu0 0.0
        %564 = vmatpush.msra.mxu0 0.0
        %565 = vmatpush.msra.mxu0 0.0
        %566 = vmatpush.msra.mxu0 0.0
        %567 = vmatpush.msra.mxu0 0.0
        %568 = vmatpush.msra.mxu0 0.0
        %569 = vmatpush.msra.mxu0 0.0
        %570 = vmatpush.msra.mxu0 0.0
        %571 = vmatpush.msra.mxu0 0.0
        %572 = vmatpush.msra.mxu0 0.0
        %v573 = vand.u32 %v528, 4294901760
        %v574 = vsub.f32 %v528, %v573
        %v575 = vand.u32 %v574, 4294901760
        %v576 = vsub.f32 %v574, %v575
        %v577 = vand.u32 %v576, 4294901760
        %578 = vmatpush.msra.mxu0 %v577
        %v579 = vand.u32 %v526, 4294901760
        %580 = vmatmul.f32.gmra.mxu0 %v579
        %v581 = vpop.f32.mrf.mxu0
        %v582 = vadd.f32 %v556, %v581
        %583 = vdwg.mxu0
        %584 = vmatpush.msra.mxu0 0.0
        %585 = vmatpush.msra.mxu0 0.0
        %586 = vmatpush.msra.mxu0 0.0
        %587 = vmatpush.msra.mxu0 0.0
        %588 = vmatpush.msra.mxu0 0.0
        %589 = vmatpush.msra.mxu0 0.0
        %590 = vmatpush.msra.mxu0 0.0
        %591 = vmatpush.msra.mxu0 0.0
        %592 = vmatpush.msra.mxu0 0.0
        %593 = vmatpush.msra.mxu0 0.0
        %594 = vmatpush.msra.mxu0 0.0
        %595 = vmatpush.msra.mxu0 0.0
        %596 = vmatpush.msra.mxu0 0.0
        %597 = vmatpush.msra.mxu0 0.0
        %598 = vmatpush.msra.mxu0 0.0
        %v599 = vand.u32 %v528, 4294901760
        %v600 = vsub.f32 %v528, %v599
        %601 = vmatpush.msra.mxu0 %v600
        %v602 = vand.u32 %v526, 4294901760
        %v603 = vsub.f32 %v526, %v602
        %604 = vmatmul.f32.gmra.mxu0 %v603
        %v605 = vpop.f32.mrf.mxu0
        %v606 = vadd.f32 %v582, %v605
        %607 = vdwg.mxu0
        %608 = vmatpush.msra.mxu0 0.0
        %609 = vmatpush.msra.mxu0 0.0
        %610 = vmatpush.msra.mxu0 0.0
        %611 = vmatpush.msra.mxu0 0.0
        %612 = vmatpush.msra.mxu0 0.0
        %613 = vmatpush.msra.mxu0 0.0
        %614 = vmatpush.msra.mxu0 0.0
        %615 = vmatpush.msra.mxu0 0.0
        %616 = vmatpush.msra.mxu0 0.0
        %617 = vmatpush.msra.mxu0 0.0
        %618 = vmatpush.msra.mxu0 0.0
        %619 = vmatpush.msra.mxu0 0.0
        %620 = vmatpush.msra.mxu0 0.0
        %621 = vmatpush.msra.mxu0 0.0
        %622 = vmatpush.msra.mxu0 0.0
        %v623 = vand.u32 %v528, 4294901760
        %624 = vmatpush.msra.mxu0 %v623
        %v625 = vand.u32 %v526, 4294901760
        %v626 = vsub.f32 %v526, %v625
        %v627 = vand.u32 %v626, 4294901760
        %628 = vmatmul.f32.gmra.mxu0 %v627
        %v629 = vpop.f32.mrf.mxu0
        %v630 = vadd.f32 %v606, %v629
        %631 = vdwg.mxu0
        %632 = vmatpush.msra.mxu0 0.0
        %633 = vmatpush.msra.mxu0 0.0
        %634 = vmatpush.msra.mxu0 0.0
        %635 = vmatpush.msra.mxu0 0.0
        %636 = vmatpush.msra.mxu0 0.0
        %637 = vmatpush.msra.mxu0 0.0
        %638 = vmatpush.msra.mxu0 0.0
        %639 = vmatpush.msra.mxu0 0.0
        %640 = vmatpush.msra.mxu0 0.0
        %641 = vmatpush.msra.mxu0 0.0
        %642 = vmatpush.msra.mxu0 0.0
        %643 = vmatpush.msra.mxu0 0.0
        %644 = vmatpush.msra.mxu0 0.0
        %645 = vmatpush.msra.mxu0 0.0
        %646 = vmatpush.msra.mxu0 0.0
        %v647 = vand.u32 %v528, 4294901760
        %v648 = vsub.f32 %v528, %v647
        %v649 = vand.u32 %v648, 4294901760
        %650 = vmatpush.msra.mxu0 %v649
        %v651 = vand.u32 %v526, 4294901760
        %652 = vmatmul.f32.gmra.mxu0 %v651
        %v653 = vpop.f32.mrf.mxu0
        %v654 = vadd.f32 %v630, %v653
        %655 = vdwg.mxu0
        %656 = vmatpush.msra.mxu0 0.0
        %657 = vmatpush.msra.mxu0 0.0
        %658 = vmatpush.msra.mxu0 0.0
        %659 = vmatpush.msra.mxu0 0.0
        %660 = vmatpush.msra.mxu0 0.0
        %661 = vmatpush.msra.mxu0 0.0
        %662 = vmatpush.msra.mxu0 0.0
        %663 = vmatpush.msra.mxu0 0.0
        %664 = vmatpush.msra.mxu0 0.0
        %665 = vmatpush.msra.mxu0 0.0
        %666 = vmatpush.msra.mxu0 0.0
        %667 = vmatpush.msra.mxu0 0.0
        %668 = vmatpush.msra.mxu0 0.0
        %669 = vmatpush.msra.mxu0 0.0
        %670 = vmatpush.msra.mxu0 0.0
        %v671 = vand.u32 %v528, 4294901760
        %672 = vmatpush.msra.mxu0 %v671
        %v673 = vand.u32 %v526, 4294901760
        %674 = vmatmul.f32.gmra.mxu0 %v673
        %v675 = vpop.f32.mrf.mxu0
        %v676 = vadd.f32 %v654, %v675
        %677 = vdwg.mxu0
        %678 = vmatpush.msra.mxu0 0.0
        %679 = vmatpush.msra.mxu0 0.0
        %680 = vmatpush.msra.mxu0 0.0
        %681 = vmatpush.msra.mxu0 0.0
        %682 = vmatpush.msra.mxu0 0.0
        %683 = vmatpush.msra.mxu0 0.0
        %684 = vmatpush.msra.mxu0 0.0
        %685 = vmatpush.msra.mxu0 0.0
        %686 = vmatpush.msra.mxu0 0.0
        %687 = vmatpush.msra.mxu0 0.0
        %688 = vmatpush.msra.mxu0 0.0
        %689 = vmatpush.msra.mxu0 0.0
        %690 = vmatpush.msra.mxu0 0.0
        %691 = vmatpush.msra.mxu0 0.0
        %692 = vmatpush.msra.mxu0 0.0
        %v693 = vand.u32 %v530, 4294901760
        %694 = vmatpush.msra.mxu0 %v693
        %v695 = vand.u32 %v526, 4294901760
        %v696 = vsub.f32 %v526, %v695
        %v697 = vand.u32 %v696, 4294901760
        %v698 = vsub.f32 %v696, %v697
        %v699 = vand.u32 %v698, 4294901760
        %700 = vmatmul.f32.gmra.mxu0 %v699
        %v701 = vpop.f32.mrf.mxu0
        %v702 = vadd.f32 0.0, %v701
        %703 = vdwg.mxu0
        %704 = vmatpush.msra.mxu0 0.0
        %705 = vmatpush.msra.mxu0 0.0
        %706 = vmatpush.msra.mxu0 0.0
        %707 = vmatpush.msra.mxu0 0.0
        %708 = vmatpush.msra.mxu0 0.0
        %709 = vmatpush.msra.mxu0 0.0
        %710 = vmatpush.msra.mxu0 0.0
        %711 = vmatpush.msra.mxu0 0.0
        %712 = vmatpush.msra.mxu0 0.0
        %713 = vmatpush.msra.mxu0 0.0
        %714 = vmatpush.msra.mxu0 0.0
        %715 = vmatpush.msra.mxu0 0.0
        %716 = vmatpush.msra.mxu0 0.0
        %717 = vmatpush.msra.mxu0 0.0
        %718 = vmatpush.msra.mxu0 0.0
        %v719 = vand.u32 %v530, 4294901760
        %v720 = vsub.f32 %v530, %v719
        %v721 = vand.u32 %v720, 4294901760
        %v722 = vsub.f32 %v720, %v721
        %v723 = vand.u32 %v722, 4294901760
        %724 = vmatpush.msra.mxu0 %v723
        %v725 = vand.u32 %v526, 4294901760
        %726 = vmatmul.f32.gmra.mxu0 %v725
        %v727 = vpop.f32.mrf.mxu0
        %v728 = vadd.f32 %v702, %v727
        %729 = vdwg.mxu0
        %730 = vmatpush.msra.mxu0 0.0
        %731 = vmatpush.msra.mxu0 0.0
        %732 = vmatpush.msra.mxu0 0.0
        %733 = vmatpush.msra.mxu0 0.0
        %734 = vmatpush.msra.mxu0 0.0
        %735 = vmatpush.msra.mxu0 0.0
        %736 = vmatpush.msra.mxu0 0.0
        %737 = vmatpush.msra.mxu0 0.0
        %738 = vmatpush.msra.mxu0 0.0
        %739 = vmatpush.msra.mxu0 0.0
        %740 = vmatpush.msra.mxu0 0.0
        %741 = vmatpush.msra.mxu0 0.0
        %742 = vmatpush.msra.mxu0 0.0
        %743 = vmatpush.msra.mxu0 0.0
        %744 = vmatpush.msra.mxu0 0.0
        %v745 = vand.u32 %v530, 4294901760
        %v746 = vsub.f32 %v530, %v745
        %747 = vmatpush.msra.mxu0 %v746
        %v748 = vand.u32 %v526, 4294901760
        %v749 = vsub.f32 %v526, %v748
        %750 = vmatmul.f32.gmra.mxu0 %v749
        %v751 = vpop.f32.mrf.mxu0
        %v752 = vadd.f32 %v728, %v751
        %753 = vdwg.mxu0
        %754 = vmatpush.msra.mxu0 0.0
        %755 = vmatpush.msra.mxu0 0.0
        %756 = vmatpush.msra.mxu0 0.0
        %757 = vmatpush.msra.mxu0 0.0
        %758 = vmatpush.msra.mxu0 0.0
        %759 = vmatpush.msra.mxu0 0.0
        %760 = vmatpush.msra.mxu0 0.0
        %761 = vmatpush.msra.mxu0 0.0
        %762 = vmatpush.msra.mxu0 0.0
        %763 = vmatpush.msra.mxu0 0.0
        %764 = vmatpush.msra.mxu0 0.0
        %765 = vmatpush.msra.mxu0 0.0
        %766 = vmatpush.msra.mxu0 0.0
        %767 = vmatpush.msra.mxu0 0.0
        %768 = vmatpush.msra.mxu0 0.0
        %v769 = vand.u32 %v530, 4294901760
        %770 = vmatpush.msra.mxu0 %v769
        %v771 = vand.u32 %v526, 4294901760
        %v772 = vsub.f32 %v526, %v771
        %v773 = vand.u32 %v772, 4294901760
        %774 = vmatmul.f32.gmra.mxu0 %v773
        %v775 = vpop.f32.mrf.mxu0
        %v776 = vadd.f32 %v752, %v775
        %777 = vdwg.mxu0
        %778 = vmatpush.msra.mxu0 0.0
        %779 = vmatpush.msra.mxu0 0.0
        %780 = vmatpush.msra.mxu0 0.0
        %781 = vmatpush.msra.mxu0 0.0
        %782 = vmatpush.msra.mxu0 0.0
        %783 = vmatpush.msra.mxu0 0.0
        %784 = vmatpush.msra.mxu0 0.0
        %785 = vmatpush.msra.mxu0 0.0
        %786 = vmatpush.msra.mxu0 0.0
        %787 = vmatpush.msra.mxu0 0.0
        %788 = vmatpush.msra.mxu0 0.0
        %789 = vmatpush.msra.mxu0 0.0
        %790 = vmatpush.msra.mxu0 0.0
        %791 = vmatpush.msra.mxu0 0.0
        %792 = vmatpush.msra.mxu0 0.0
        %v793 = vand.u32 %v530, 4294901760
        %v794 = vsub.f32 %v530, %v793
        %v795 = vand.u32 %v794, 4294901760
        %796 = vmatpush.msra.mxu0 %v795
        %v797 = vand.u32 %v526, 4294901760
        %798 = vmatmul.f32.gmra.mxu0 %v797
        %v799 = vpop.f32.mrf.mxu0
        %v800 = vadd.f32 %v776, %v799
        %801 = vdwg.mxu0
        %802 = vmatpush.msra.mxu0 0.0
        %803 = vmatpush.msra.mxu0 0.0
        %804 = vmatpush.msra.mxu0 0.0
        %805 = vmatpush.msra.mxu0 0.0
        %806 = vmatpush.msra.mxu0 0.0
        %807 = vmatpush.msra.mxu0 0.0
        %808 = vmatpush.msra.mxu0 0.0
        %809 = vmatpush.msra.mxu0 0.0
        %810 = vmatpush.msra.mxu0 0.0
        %811 = vmatpush.msra.mxu0 0.0
        %812 = vmatpush.msra.mxu0 0.0
        %813 = vmatpush.msra.mxu0 0.0
        %814 = vmatpush.msra.mxu0 0.0
        %815 = vmatpush.msra.mxu0 0.0
        %816 = vmatpush.msra.mxu0 0.0
        %v817 = vand.u32 %v530, 4294901760
        %818 = vmatpush.msra.mxu0 %v817
        %v819 = vand.u32 %v526, 4294901760
        %820 = vmatmul.f32.gmra.mxu0 %v819
        %v821 = vpop.f32.mrf.mxu0
        %v822 = vadd.f32 %v800, %v821
        %823 = vdwg.mxu0
        %v824 = vld [vmem:[%s185 + $0x10] sm:$0xf]
        %v825 = vld [vmem:[%s185 + $0x18] sm:$0xf]
        %s826 = scalar_lea.vmem %s1, 16
        %v827 = vld [vmem:[%s826] sm:$0xff]
        %v829 = vsel %vm214, %v827, 0
        %v832 = vsel %vm218, %v824, 0
        %v835 = vsel %vm218, %v825, 0
        %837 = vmatpush.msra.mxu0 0.0
        %838 = vmatpush.msra.mxu0 0.0
        %839 = vmatpush.msra.mxu0 0.0
        %840 = vmatpush.msra.mxu0 0.0
        %841 = vmatpush.msra.mxu0 0.0
        %842 = vmatpush.msra.mxu0 0.0
        %843 = vmatpush.msra.mxu0 0.0
        %844 = vmatpush.msra.mxu0 0.0
        %845 = vmatpush.msra.mxu0 0.0
        %846 = vmatpush.msra.mxu0 0.0
        %847 = vmatpush.msra.mxu0 0.0
        %848 = vmatpush.msra.mxu0 0.0
        %849 = vmatpush.msra.mxu0 0.0
        %850 = vmatpush.msra.mxu0 0.0
        %851 = vmatpush.msra.mxu0 0.0
        %v852 = vand.u32 %v832, 4294901760
        %853 = vmatpush.msra.mxu0 %v852
        %v854 = vand.u32 %v829, 4294901760
        %v855 = vsub.f32 %v829, %v854
        %v856 = vand.u32 %v855, 4294901760
        %v857 = vsub.f32 %v855, %v856
        %v858 = vand.u32 %v857, 4294901760
        %859 = vmatmul.f32.gmra.mxu0 %v858
        %v860 = vpop.f32.mrf.mxu0
        %v861 = vadd.f32 0.0, %v860
        %862 = vdwg.mxu0
        %863 = vmatpush.msra.mxu0 0.0
        %864 = vmatpush.msra.mxu0 0.0
        %865 = vmatpush.msra.mxu0 0.0
        %866 = vmatpush.msra.mxu0 0.0
        %867 = vmatpush.msra.mxu0 0.0
        %868 = vmatpush.msra.mxu0 0.0
        %869 = vmatpush.msra.mxu0 0.0
        %870 = vmatpush.msra.mxu0 0.0
        %871 = vmatpush.msra.mxu0 0.0
        %872 = vmatpush.msra.mxu0 0.0
        %873 = vmatpush.msra.mxu0 0.0
        %874 = vmatpush.msra.mxu0 0.0
        %875 = vmatpush.msra.mxu0 0.0
        %876 = vmatpush.msra.mxu0 0.0
        %877 = vmatpush.msra.mxu0 0.0
        %v878 = vand.u32 %v832, 4294901760
        %v879 = vsub.f32 %v832, %v878
        %v880 = vand.u32 %v879, 4294901760
        %v881 = vsub.f32 %v879, %v880
        %v882 = vand.u32 %v881, 4294901760
        %883 = vmatpush.msra.mxu0 %v882
        %v884 = vand.u32 %v829, 4294901760
        %885 = vmatmul.f32.gmra.mxu0 %v884
        %v886 = vpop.f32.mrf.mxu0
        %v887 = vadd.f32 %v861, %v886
        %888 = vdwg.mxu0
        %889 = vmatpush.msra.mxu0 0.0
        %890 = vmatpush.msra.mxu0 0.0
        %891 = vmatpush.msra.mxu0 0.0
        %892 = vmatpush.msra.mxu0 0.0
        %893 = vmatpush.msra.mxu0 0.0
        %894 = vmatpush.msra.mxu0 0.0
        %895 = vmatpush.msra.mxu0 0.0
        %896 = vmatpush.msra.mxu0 0.0
        %897 = vmatpush.msra.mxu0 0.0
        %898 = vmatpush.msra.mxu0 0.0
        %899 = vmatpush.msra.mxu0 0.0
        %900 = vmatpush.msra.mxu0 0.0
        %901 = vmatpush.msra.mxu0 0.0
        %902 = vmatpush.msra.mxu0 0.0
        %903 = vmatpush.msra.mxu0 0.0
        %v904 = vand.u32 %v832, 4294901760
        %v905 = vsub.f32 %v832, %v904
        %906 = vmatpush.msra.mxu0 %v905
        %v907 = vand.u32 %v829, 4294901760
        %v908 = vsub.f32 %v829, %v907
        %909 = vmatmul.f32.gmra.mxu0 %v908
        %v910 = vpop.f32.mrf.mxu0
        %v911 = vadd.f32 %v887, %v910
        %912 = vdwg.mxu0
        %913 = vmatpush.msra.mxu0 0.0
        %914 = vmatpush.msra.mxu0 0.0
        %915 = vmatpush.msra.mxu0 0.0
        %916 = vmatpush.msra.mxu0 0.0
        %917 = vmatpush.msra.mxu0 0.0
        %918 = vmatpush.msra.mxu0 0.0
        %919 = vmatpush.msra.mxu0 0.0
        %920 = vmatpush.msra.mxu0 0.0
        %921 = vmatpush.msra.mxu0 0.0
        %922 = vmatpush.msra.mxu0 0.0
        %923 = vmatpush.msra.mxu0 0.0
        %924 = vmatpush.msra.mxu0 0.0
        %925 = vmatpush.msra.mxu0 0.0
        %926 = vmatpush.msra.mxu0 0.0
        %927 = vmatpush.msra.mxu0 0.0
        %v928 = vand.u32 %v832, 4294901760
        %929 = vmatpush.msra.mxu0 %v928
        %v930 = vand.u32 %v829, 4294901760
        %v931 = vsub.f32 %v829, %v930
        %v932 = vand.u32 %v931, 4294901760
        %933 = vmatmul.f32.gmra.mxu0 %v932
        %v934 = vpop.f32.mrf.mxu0
        %v935 = vadd.f32 %v911, %v934
        %936 = vdwg.mxu0
        %937 = vmatpush.msra.mxu0 0.0
        %938 = vmatpush.msra.mxu0 0.0
        %939 = vmatpush.msra.mxu0 0.0
        %940 = vmatpush.msra.mxu0 0.0
        %941 = vmatpush.msra.mxu0 0.0
        %942 = vmatpush.msra.mxu0 0.0
        %943 = vmatpush.msra.mxu0 0.0
        %944 = vmatpush.msra.mxu0 0.0
        %945 = vmatpush.msra.mxu0 0.0
        %946 = vmatpush.msra.mxu0 0.0
        %947 = vmatpush.msra.mxu0 0.0
        %948 = vmatpush.msra.mxu0 0.0
        %949 = vmatpush.msra.mxu0 0.0
        %950 = vmatpush.msra.mxu0 0.0
        %951 = vmatpush.msra.mxu0 0.0
        %v952 = vand.u32 %v832, 4294901760
        %v953 = vsub.f32 %v832, %v952
        %v954 = vand.u32 %v953, 4294901760
        %955 = vmatpush.msra.mxu0 %v954
        %v956 = vand.u32 %v829, 4294901760
        %957 = vmatmul.f32.gmra.mxu0 %v956
        %v958 = vpop.f32.mrf.mxu0
        %v959 = vadd.f32 %v935, %v958
        %960 = vdwg.mxu0
        %961 = vmatpush.msra.mxu0 0.0
        %962 = vmatpush.msra.mxu0 0.0
        %963 = vmatpush.msra.mxu0 0.0
        %964 = vmatpush.msra.mxu0 0.0
        %965 = vmatpush.msra.mxu0 0.0
        %966 = vmatpush.msra.mxu0 0.0
        %967 = vmatpush.msra.mxu0 0.0
        %968 = vmatpush.msra.mxu0 0.0
        %969 = vmatpush.msra.mxu0 0.0
        %970 = vmatpush.msra.mxu0 0.0
        %971 = vmatpush.msra.mxu0 0.0
        %972 = vmatpush.msra.mxu0 0.0
        %973 = vmatpush.msra.mxu0 0.0
        %974 = vmatpush.msra.mxu0 0.0
        %975 = vmatpush.msra.mxu0 0.0
        %v976 = vand.u32 %v832, 4294901760
        %977 = vmatpush.msra.mxu0 %v976
        %v978 = vand.u32 %v829, 4294901760
        %979 = vmatmul.f32.gmra.mxu0 %v978
        %v980 = vpop.f32.mrf.mxu0
        %v981 = vadd.f32 %v959, %v980
        %982 = vdwg.mxu0
        %983 = vmatpush.msra.mxu0 0.0
        %984 = vmatpush.msra.mxu0 0.0
        %985 = vmatpush.msra.mxu0 0.0
        %986 = vmatpush.msra.mxu0 0.0
        %987 = vmatpush.msra.mxu0 0.0
        %988 = vmatpush.msra.mxu0 0.0
        %989 = vmatpush.msra.mxu0 0.0
        %990 = vmatpush.msra.mxu0 0.0
        %991 = vmatpush.msra.mxu0 0.0
        %992 = vmatpush.msra.mxu0 0.0
        %993 = vmatpush.msra.mxu0 0.0
        %994 = vmatpush.msra.mxu0 0.0
        %995 = vmatpush.msra.mxu0 0.0
        %996 = vmatpush.msra.mxu0 0.0
        %997 = vmatpush.msra.mxu0 0.0
        %v998 = vand.u32 %v835, 4294901760
        %999 = vmatpush.msra.mxu0 %v998
        %v1000 = vand.u32 %v829, 4294901760
        %v1001 = vsub.f32 %v829, %v1000
        %v1002 = vand.u32 %v1001, 4294901760
        %v1003 = vsub.f32 %v1001, %v1002
        %v1004 = vand.u32 %v1003, 4294901760
        %1005 = vmatmul.f32.gmra.mxu0 %v1004
        %v1006 = vpop.f32.mrf.mxu0
        %v1007 = vadd.f32 0.0, %v1006
        %1008 = vdwg.mxu0
        %1009 = vmatpush.msra.mxu0 0.0
        %1010 = vmatpush.msra.mxu0 0.0
        %1011 = vmatpush.msra.mxu0 0.0
        %1012 = vmatpush.msra.mxu0 0.0
        %1013 = vmatpush.msra.mxu0 0.0
        %1014 = vmatpush.msra.mxu0 0.0
        %1015 = vmatpush.msra.mxu0 0.0
        %1016 = vmatpush.msra.mxu0 0.0
        %1017 = vmatpush.msra.mxu0 0.0
        %1018 = vmatpush.msra.mxu0 0.0
        %1019 = vmatpush.msra.mxu0 0.0
        %1020 = vmatpush.msra.mxu0 0.0
        %1021 = vmatpush.msra.mxu0 0.0
        %1022 = vmatpush.msra.mxu0 0.0
        %1023 = vmatpush.msra.mxu0 0.0
        %v1024 = vand.u32 %v835, 4294901760
        %v1025 = vsub.f32 %v835, %v1024
        %v1026 = vand.u32 %v1025, 4294901760
        %v1027 = vsub.f32 %v1025, %v1026
        %v1028 = vand.u32 %v1027, 4294901760
        %1029 = vmatpush.msra.mxu0 %v1028
        %v1030 = vand.u32 %v829, 4294901760
        %1031 = vmatmul.f32.gmra.mxu0 %v1030
        %v1032 = vpop.f32.mrf.mxu0
        %v1033 = vadd.f32 %v1007, %v1032
        %1034 = vdwg.mxu0
        %1035 = vmatpush.msra.mxu0 0.0
        %1036 = vmatpush.msra.mxu0 0.0
        %1037 = vmatpush.msra.mxu0 0.0
        %1038 = vmatpush.msra.mxu0 0.0
        %1039 = vmatpush.msra.mxu0 0.0
        %1040 = vmatpush.msra.mxu0 0.0
        %1041 = vmatpush.msra.mxu0 0.0
        %1042 = vmatpush.msra.mxu0 0.0
        %1043 = vmatpush.msra.mxu0 0.0
        %1044 = vmatpush.msra.mxu0 0.0
        %1045 = vmatpush.msra.mxu0 0.0
        %1046 = vmatpush.msra.mxu0 0.0
        %1047 = vmatpush.msra.mxu0 0.0
        %1048 = vmatpush.msra.mxu0 0.0
        %1049 = vmatpush.msra.mxu0 0.0
        %v1050 = vand.u32 %v835, 4294901760
        %v1051 = vsub.f32 %v835, %v1050
        %1052 = vmatpush.msra.mxu0 %v1051
        %v1053 = vand.u32 %v829, 4294901760
        %v1054 = vsub.f32 %v829, %v1053
        %1055 = vmatmul.f32.gmra.mxu0 %v1054
        %v1056 = vpop.f32.mrf.mxu0
        %v1057 = vadd.f32 %v1033, %v1056
        %1058 = vdwg.mxu0
        %1059 = vmatpush.msra.mxu0 0.0
        %1060 = vmatpush.msra.mxu0 0.0
        %1061 = vmatpush.msra.mxu0 0.0
        %1062 = vmatpush.msra.mxu0 0.0
        %1063 = vmatpush.msra.mxu0 0.0
        %1064 = vmatpush.msra.mxu0 0.0
        %1065 = vmatpush.msra.mxu0 0.0
        %1066 = vmatpush.msra.mxu0 0.0
        %1067 = vmatpush.msra.mxu0 0.0
        %1068 = vmatpush.msra.mxu0 0.0
        %1069 = vmatpush.msra.mxu0 0.0
        %1070 = vmatpush.msra.mxu0 0.0
        %1071 = vmatpush.msra.mxu0 0.0
        %1072 = vmatpush.msra.mxu0 0.0
        %1073 = vmatpush.msra.mxu0 0.0
        %v1074 = vand.u32 %v835, 4294901760
        %1075 = vmatpush.msra.mxu0 %v1074
        %v1076 = vand.u32 %v829, 4294901760
        %v1077 = vsub.f32 %v829, %v1076
        %v1078 = vand.u32 %v1077, 4294901760
        %1079 = vmatmul.f32.gmra.mxu0 %v1078
        %v1080 = vpop.f32.mrf.mxu0
        %v1081 = vadd.f32 %v1057, %v1080
        %1082 = vdwg.mxu0
        %1083 = vmatpush.msra.mxu0 0.0
        %1084 = vmatpush.msra.mxu0 0.0
        %1085 = vmatpush.msra.mxu0 0.0
        %1086 = vmatpush.msra.mxu0 0.0
        %1087 = vmatpush.msra.mxu0 0.0
        %1088 = vmatpush.msra.mxu0 0.0
        %1089 = vmatpush.msra.mxu0 0.0
        %1090 = vmatpush.msra.mxu0 0.0
        %1091 = vmatpush.msra.mxu0 0.0
        %1092 = vmatpush.msra.mxu0 0.0
        %1093 = vmatpush.msra.mxu0 0.0
        %1094 = vmatpush.msra.mxu0 0.0
        %1095 = vmatpush.msra.mxu0 0.0
        %1096 = vmatpush.msra.mxu0 0.0
        %1097 = vmatpush.msra.mxu0 0.0
        %v1098 = vand.u32 %v835, 4294901760
        %v1099 = vsub.f32 %v835, %v1098
        %v1100 = vand.u32 %v1099, 4294901760
        %1101 = vmatpush.msra.mxu0 %v1100
        %v1102 = vand.u32 %v829, 4294901760
        %1103 = vmatmul.f32.gmra.mxu0 %v1102
        %v1104 = vpop.f32.mrf.mxu0
        %v1105 = vadd.f32 %v1081, %v1104
        %1106 = vdwg.mxu0
        %1107 = vmatpush.msra.mxu0 0.0
        %1108 = vmatpush.msra.mxu0 0.0
        %1109 = vmatpush.msra.mxu0 0.0
        %1110 = vmatpush.msra.mxu0 0.0
        %1111 = vmatpush.msra.mxu0 0.0
        %1112 = vmatpush.msra.mxu0 0.0
        %1113 = vmatpush.msra.mxu0 0.0
        %1114 = vmatpush.msra.mxu0 0.0
        %1115 = vmatpush.msra.mxu0 0.0
        %1116 = vmatpush.msra.mxu0 0.0
        %1117 = vmatpush.msra.mxu0 0.0
        %1118 = vmatpush.msra.mxu0 0.0
        %1119 = vmatpush.msra.mxu0 0.0
        %1120 = vmatpush.msra.mxu0 0.0
        %1121 = vmatpush.msra.mxu0 0.0
        %v1122 = vand.u32 %v835, 4294901760
        %1123 = vmatpush.msra.mxu0 %v1122
        %v1124 = vand.u32 %v829, 4294901760
        %1125 = vmatmul.f32.gmra.mxu0 %v1124
        %v1126 = vpop.f32.mrf.mxu0
        %v1127 = vadd.f32 %v1105, %v1126
        %1128 = vdwg.mxu0
        %v1129 = vld [vmem:[%s185 + $0x10] sm:$0xf0]
        %v1130 = vld [vmem:[%s185 + $0x18] sm:$0xf0]
        %s1131 = scalar_lea.vmem %s1, 24
        %v1132 = vld [vmem:[%s1131] sm:$0xff]
        %v1135 = vrot.slane %v1129, 4
        %v1136 = vrot.slane %v1130, 4
        %v1138 = vsel %vm214, %v1132, 0
        %v1140 = vsel %vm218, %v1135, 0
        %v1142 = vsel %vm218, %v1136, 0
        %1144 = vmatpush.msra.mxu0 0.0
        %1145 = vmatpush.msra.mxu0 0.0
        %1146 = vmatpush.msra.mxu0 0.0
        %1147 = vmatpush.msra.mxu0 0.0
        %1148 = vmatpush.msra.mxu0 0.0
        %1149 = vmatpush.msra.mxu0 0.0
        %1150 = vmatpush.msra.mxu0 0.0
        %1151 = vmatpush.msra.mxu0 0.0
        %1152 = vmatpush.msra.mxu0 0.0
        %1153 = vmatpush.msra.mxu0 0.0
        %1154 = vmatpush.msra.mxu0 0.0
        %1155 = vmatpush.msra.mxu0 0.0
        %1156 = vmatpush.msra.mxu0 0.0
        %1157 = vmatpush.msra.mxu0 0.0
        %1158 = vmatpush.msra.mxu0 0.0
        %v1159 = vand.u32 %v1140, 4294901760
        %1160 = vmatpush.msra.mxu0 %v1159
        %v1161 = vand.u32 %v1138, 4294901760
        %v1162 = vsub.f32 %v1138, %v1161
        %v1163 = vand.u32 %v1162, 4294901760
        %v1164 = vsub.f32 %v1162, %v1163
        %v1165 = vand.u32 %v1164, 4294901760
        %1166 = vmatmul.f32.gmra.mxu0 %v1165
        %v1167 = vpop.f32.mrf.mxu0
        %v1168 = vadd.f32 0.0, %v1167
        %1169 = vdwg.mxu0
        %1170 = vmatpush.msra.mxu0 0.0
        %1171 = vmatpush.msra.mxu0 0.0
        %1172 = vmatpush.msra.mxu0 0.0
        %1173 = vmatpush.msra.mxu0 0.0
        %1174 = vmatpush.msra.mxu0 0.0
        %1175 = vmatpush.msra.mxu0 0.0
        %1176 = vmatpush.msra.mxu0 0.0
        %1177 = vmatpush.msra.mxu0 0.0
        %1178 = vmatpush.msra.mxu0 0.0
        %1179 = vmatpush.msra.mxu0 0.0
        %1180 = vmatpush.msra.mxu0 0.0
        %1181 = vmatpush.msra.mxu0 0.0
        %1182 = vmatpush.msra.mxu0 0.0
        %1183 = vmatpush.msra.mxu0 0.0
        %1184 = vmatpush.msra.mxu0 0.0
        %v1185 = vand.u32 %v1140, 4294901760
        %v1186 = vsub.f32 %v1140, %v1185
        %v1187 = vand.u32 %v1186, 4294901760
        %v1188 = vsub.f32 %v1186, %v1187
        %v1189 = vand.u32 %v1188, 4294901760
        %1190 = vmatpush.msra.mxu0 %v1189
        %v1191 = vand.u32 %v1138, 4294901760
        %1192 = vmatmul.f32.gmra.mxu0 %v1191
        %v1193 = vpop.f32.mrf.mxu0
        %v1194 = vadd.f32 %v1168, %v1193
        %1195 = vdwg.mxu0
        %1196 = vmatpush.msra.mxu0 0.0
        %1197 = vmatpush.msra.mxu0 0.0
        %1198 = vmatpush.msra.mxu0 0.0
        %1199 = vmatpush.msra.mxu0 0.0
        %1200 = vmatpush.msra.mxu0 0.0
        %1201 = vmatpush.msra.mxu0 0.0
        %1202 = vmatpush.msra.mxu0 0.0
        %1203 = vmatpush.msra.mxu0 0.0
        %1204 = vmatpush.msra.mxu0 0.0
        %1205 = vmatpush.msra.mxu0 0.0
        %1206 = vmatpush.msra.mxu0 0.0
        %1207 = vmatpush.msra.mxu0 0.0
        %1208 = vmatpush.msra.mxu0 0.0
        %1209 = vmatpush.msra.mxu0 0.0
        %1210 = vmatpush.msra.mxu0 0.0
        %v1211 = vand.u32 %v1140, 4294901760
        %v1212 = vsub.f32 %v1140, %v1211
        %1213 = vmatpush.msra.mxu0 %v1212
        %v1214 = vand.u32 %v1138, 4294901760
        %v1215 = vsub.f32 %v1138, %v1214
        %1216 = vmatmul.f32.gmra.mxu0 %v1215
        %v1217 = vpop.f32.mrf.mxu0
        %v1218 = vadd.f32 %v1194, %v1217
        %1219 = vdwg.mxu0
        %1220 = vmatpush.msra.mxu0 0.0
        %1221 = vmatpush.msra.mxu0 0.0
        %1222 = vmatpush.msra.mxu0 0.0
        %1223 = vmatpush.msra.mxu0 0.0
        %1224 = vmatpush.msra.mxu0 0.0
        %1225 = vmatpush.msra.mxu0 0.0
        %1226 = vmatpush.msra.mxu0 0.0
        %1227 = vmatpush.msra.mxu0 0.0
        %1228 = vmatpush.msra.mxu0 0.0
        %1229 = vmatpush.msra.mxu0 0.0
        %1230 = vmatpush.msra.mxu0 0.0
        %1231 = vmatpush.msra.mxu0 0.0
        %1232 = vmatpush.msra.mxu0 0.0
        %1233 = vmatpush.msra.mxu0 0.0
        %1234 = vmatpush.msra.mxu0 0.0
        %v1235 = vand.u32 %v1140, 4294901760
        %1236 = vmatpush.msra.mxu0 %v1235
        %v1237 = vand.u32 %v1138, 4294901760
        %v1238 = vsub.f32 %v1138, %v1237
        %v1239 = vand.u32 %v1238, 4294901760
        %1240 = vmatmul.f32.gmra.mxu0 %v1239
        %v1241 = vpop.f32.mrf.mxu0
        %v1242 = vadd.f32 %v1218, %v1241
        %1243 = vdwg.mxu0
        %1244 = vmatpush.msra.mxu0 0.0
        %1245 = vmatpush.msra.mxu0 0.0
        %1246 = vmatpush.msra.mxu0 0.0
        %1247 = vmatpush.msra.mxu0 0.0
        %1248 = vmatpush.msra.mxu0 0.0
        %1249 = vmatpush.msra.mxu0 0.0
        %1250 = vmatpush.msra.mxu0 0.0
        %1251 = vmatpush.msra.mxu0 0.0
        %1252 = vmatpush.msra.mxu0 0.0
        %1253 = vmatpush.msra.mxu0 0.0
        %1254 = vmatpush.msra.mxu0 0.0
        %1255 = vmatpush.msra.mxu0 0.0
        %1256 = vmatpush.msra.mxu0 0.0
        %1257 = vmatpush.msra.mxu0 0.0
        %1258 = vmatpush.msra.mxu0 0.0
        %v1259 = vand.u32 %v1140, 4294901760
        %v1260 = vsub.f32 %v1140, %v1259
        %v1261 = vand.u32 %v1260, 4294901760
        %1262 = vmatpush.msra.mxu0 %v1261
        %v1263 = vand.u32 %v1138, 4294901760
        %1264 = vmatmul.f32.gmra.mxu0 %v1263
        %v1265 = vpop.f32.mrf.mxu0
        %v1266 = vadd.f32 %v1242, %v1265
        %1267 = vdwg.mxu0
        %1268 = vmatpush.msra.mxu0 0.0
        %1269 = vmatpush.msra.mxu0 0.0
        %1270 = vmatpush.msra.mxu0 0.0
        %1271 = vmatpush.msra.mxu0 0.0
        %1272 = vmatpush.msra.mxu0 0.0
        %1273 = vmatpush.msra.mxu0 0.0
        %1274 = vmatpush.msra.mxu0 0.0
        %1275 = vmatpush.msra.mxu0 0.0
        %1276 = vmatpush.msra.mxu0 0.0
        %1277 = vmatpush.msra.mxu0 0.0
        %1278 = vmatpush.msra.mxu0 0.0
        %1279 = vmatpush.msra.mxu0 0.0
        %1280 = vmatpush.msra.mxu0 0.0
        %1281 = vmatpush.msra.mxu0 0.0
        %1282 = vmatpush.msra.mxu0 0.0
        %v1283 = vand.u32 %v1140, 4294901760
        %1284 = vmatpush.msra.mxu0 %v1283
        %v1285 = vand.u32 %v1138, 4294901760
        %1286 = vmatmul.f32.gmra.mxu0 %v1285
        %v1287 = vpop.f32.mrf.mxu0
        %v1288 = vadd.f32 %v1266, %v1287
        %1289 = vdwg.mxu0
        %1290 = vmatpush.msra.mxu0 0.0
        %1291 = vmatpush.msra.mxu0 0.0
        %1292 = vmatpush.msra.mxu0 0.0
        %1293 = vmatpush.msra.mxu0 0.0
        %1294 = vmatpush.msra.mxu0 0.0
        %1295 = vmatpush.msra.mxu0 0.0
        %1296 = vmatpush.msra.mxu0 0.0
        %1297 = vmatpush.msra.mxu0 0.0
        %1298 = vmatpush.msra.mxu0 0.0
        %1299 = vmatpush.msra.mxu0 0.0
        %1300 = vmatpush.msra.mxu0 0.0
        %1301 = vmatpush.msra.mxu0 0.0
        %1302 = vmatpush.msra.mxu0 0.0
        %1303 = vmatpush.msra.mxu0 0.0
        %1304 = vmatpush.msra.mxu0 0.0
        %v1305 = vand.u32 %v1142, 4294901760
        %1306 = vmatpush.msra.mxu0 %v1305
        %v1307 = vand.u32 %v1138, 4294901760
        %v1308 = vsub.f32 %v1138, %v1307
        %v1309 = vand.u32 %v1308, 4294901760
        %v1310 = vsub.f32 %v1308, %v1309
        %v1311 = vand.u32 %v1310, 4294901760
        %1312 = vmatmul.f32.gmra.mxu0 %v1311
        %v1313 = vpop.f32.mrf.mxu0
        %v1314 = vadd.f32 0.0, %v1313
        %1315 = vdwg.mxu0
        %1316 = vmatpush.msra.mxu0 0.0
        %1317 = vmatpush.msra.mxu0 0.0
        %1318 = vmatpush.msra.mxu0 0.0
        %1319 = vmatpush.msra.mxu0 0.0
        %1320 = vmatpush.msra.mxu0 0.0
        %1321 = vmatpush.msra.mxu0 0.0
        %1322 = vmatpush.msra.mxu0 0.0
        %1323 = vmatpush.msra.mxu0 0.0
        %1324 = vmatpush.msra.mxu0 0.0
        %1325 = vmatpush.msra.mxu0 0.0
        %1326 = vmatpush.msra.mxu0 0.0
        %1327 = vmatpush.msra.mxu0 0.0
        %1328 = vmatpush.msra.mxu0 0.0
        %1329 = vmatpush.msra.mxu0 0.0
        %1330 = vmatpush.msra.mxu0 0.0
        %v1331 = vand.u32 %v1142, 4294901760
        %v1332 = vsub.f32 %v1142, %v1331
        %v1333 = vand.u32 %v1332, 4294901760
        %v1334 = vsub.f32 %v1332, %v1333
        %v1335 = vand.u32 %v1334, 4294901760
        %1336 = vmatpush.msra.mxu0 %v1335
        %v1337 = vand.u32 %v1138, 4294901760
        %1338 = vmatmul.f32.gmra.mxu0 %v1337
        %v1339 = vpop.f32.mrf.mxu0
        %v1340 = vadd.f32 %v1314, %v1339
        %1341 = vdwg.mxu0
        %1342 = vmatpush.msra.mxu0 0.0
        %1343 = vmatpush.msra.mxu0 0.0
        %1344 = vmatpush.msra.mxu0 0.0
        %1345 = vmatpush.msra.mxu0 0.0
        %1346 = vmatpush.msra.mxu0 0.0
        %1347 = vmatpush.msra.mxu0 0.0
        %1348 = vmatpush.msra.mxu0 0.0
        %1349 = vmatpush.msra.mxu0 0.0
        %1350 = vmatpush.msra.mxu0 0.0
        %1351 = vmatpush.msra.mxu0 0.0
        %1352 = vmatpush.msra.mxu0 0.0
        %1353 = vmatpush.msra.mxu0 0.0
        %1354 = vmatpush.msra.mxu0 0.0
        %1355 = vmatpush.msra.mxu0 0.0
        %1356 = vmatpush.msra.mxu0 0.0
        %v1357 = vand.u32 %v1142, 4294901760
        %v1358 = vsub.f32 %v1142, %v1357
        %1359 = vmatpush.msra.mxu0 %v1358
        %v1360 = vand.u32 %v1138, 4294901760
        %v1361 = vsub.f32 %v1138, %v1360
        %1362 = vmatmul.f32.gmra.mxu0 %v1361
        %v1363 = vpop.f32.mrf.mxu0
        %v1364 = vadd.f32 %v1340, %v1363
        %1365 = vdwg.mxu0
        %1366 = vmatpush.msra.mxu0 0.0
        %1367 = vmatpush.msra.mxu0 0.0
        %1368 = vmatpush.msra.mxu0 0.0
        %1369 = vmatpush.msra.mxu0 0.0
        %1370 = vmatpush.msra.mxu0 0.0
        %1371 = vmatpush.msra.mxu0 0.0
        %1372 = vmatpush.msra.mxu0 0.0
        %1373 = vmatpush.msra.mxu0 0.0
        %1374 = vmatpush.msra.mxu0 0.0
        %1375 = vmatpush.msra.mxu0 0.0
        %1376 = vmatpush.msra.mxu0 0.0
        %1377 = vmatpush.msra.mxu0 0.0
        %1378 = vmatpush.msra.mxu0 0.0
        %1379 = vmatpush.msra.mxu0 0.0
        %1380 = vmatpush.msra.mxu0 0.0
        %v1381 = vand.u32 %v1142, 4294901760
        %1382 = vmatpush.msra.mxu0 %v1381
        %v1383 = vand.u32 %v1138, 4294901760
        %v1384 = vsub.f32 %v1138, %v1383
        %v1385 = vand.u32 %v1384, 4294901760
        %1386 = vmatmul.f32.gmra.mxu0 %v1385
        %v1387 = vpop.f32.mrf.mxu0
        %v1388 = vadd.f32 %v1364, %v1387
        %1389 = vdwg.mxu0
        %1390 = vmatpush.msra.mxu0 0.0
        %1391 = vmatpush.msra.mxu0 0.0
        %1392 = vmatpush.msra.mxu0 0.0
        %1393 = vmatpush.msra.mxu0 0.0
        %1394 = vmatpush.msra.mxu0 0.0
        %1395 = vmatpush.msra.mxu0 0.0
        %1396 = vmatpush.msra.mxu0 0.0
        %1397 = vmatpush.msra.mxu0 0.0
        %1398 = vmatpush.msra.mxu0 0.0
        %1399 = vmatpush.msra.mxu0 0.0
        %1400 = vmatpush.msra.mxu0 0.0
        %1401 = vmatpush.msra.mxu0 0.0
        %1402 = vmatpush.msra.mxu0 0.0
        %1403 = vmatpush.msra.mxu0 0.0
        %1404 = vmatpush.msra.mxu0 0.0
        %v1405 = vand.u32 %v1142, 4294901760
        %v1406 = vsub.f32 %v1142, %v1405
        %v1407 = vand.u32 %v1406, 4294901760
        %1408 = vmatpush.msra.mxu0 %v1407
        %v1409 = vand.u32 %v1138, 4294901760
        %1410 = vmatmul.f32.gmra.mxu0 %v1409
        %v1411 = vpop.f32.mrf.mxu0
        %v1412 = vadd.f32 %v1388, %v1411
        %1413 = vdwg.mxu0
        %1414 = vmatpush.msra.mxu0 0.0
        %1415 = vmatpush.msra.mxu0 0.0
        %1416 = vmatpush.msra.mxu0 0.0
        %1417 = vmatpush.msra.mxu0 0.0
        %1418 = vmatpush.msra.mxu0 0.0
        %1419 = vmatpush.msra.mxu0 0.0
        %1420 = vmatpush.msra.mxu0 0.0
        %1421 = vmatpush.msra.mxu0 0.0
        %1422 = vmatpush.msra.mxu0 0.0
        %1423 = vmatpush.msra.mxu0 0.0
        %1424 = vmatpush.msra.mxu0 0.0
        %1425 = vmatpush.msra.mxu0 0.0
        %1426 = vmatpush.msra.mxu0 0.0
        %1427 = vmatpush.msra.mxu0 0.0
        %1428 = vmatpush.msra.mxu0 0.0
        %v1429 = vand.u32 %v1142, 4294901760
        %1430 = vmatpush.msra.mxu0 %v1429
        %v1431 = vand.u32 %v1138, 4294901760
        %1432 = vmatmul.f32.gmra.mxu0 %v1431
        %v1433 = vpop.f32.mrf.mxu0
        %v1434 = vadd.f32 %v1412, %v1433
        %1435 = vdwg.mxu0
        %v1436 = vadd.f32 %v369, %v676
        %v1437 = vadd.f32 %v515, %v822
        %v1438 = vadd.f32 %v1436, %v981
        %v1439 = vadd.f32 %v1437, %v1127
        %v1440 = vadd.f32 %v1438, %v1288
        %v1441 = vadd.f32 %v1439, %v1434
        %v1442 = vmul.f32 %v1440, 0.5
        %v1443 = vmul.f32 %v1441, 0.5
        %v1444 = vmul.f32 %v1442, %v1442
        %v1445 = vmul.f32 %v1443, %v1443
        %v1446 = vrot.slane %v1444, 4
        %v1447 = vadd.f32 %v1444, %v1446
        %v1448 = vrot.slane %v1447, 2
        %v1449 = vadd.f32 %v1447, %v1448
        %v1450 = vrot.slane %v1449, 1
        %v1451 = vadd.f32 %v1449, %v1450
        %v1452 = vrot.slane %v1445, 4
        %v1453 = vadd.f32 %v1445, %v1452
        %v1454 = vrot.slane %v1453, 2
        %v1455 = vadd.f32 %v1453, %v1454
        %v1456 = vrot.slane %v1455, 1
        %v1457 = vadd.f32 %v1455, %v1456
        %v1458 = vmax.f32 %v1451, 1e-24
        %v1459 = vmax.f32 %v1457, 1e-24
        %v1460 = vrsqrt.pop %v1458
        %v1461 = vmul.f32 %v1460, %v1458
        %v1462 = vmul.f32 %v1461, %v1460
        %v1463 = vmul.f32 0.5, %v1462
        %v1464 = vsub.f32 1.5, %v1463
        %v1465 = vmul.f32 %v1460, %v1464
        %vm1466 = vweird.f32 %v1458
        %vm1467 = vweird.f32 %v1460
        %vm1468 = vmor %vm1466, %vm1467
        %v1469 = vsel %vm1468, %v1460, %v1465
        %v1470 = vrsqrt.pop %v1459
        %v1471 = vmul.f32 %v1470, %v1459
        %v1472 = vmul.f32 %v1471, %v1470
        %v1473 = vmul.f32 0.5, %v1472
        %v1474 = vsub.f32 1.5, %v1473
        %v1475 = vmul.f32 %v1470, %v1474
        %vm1476 = vweird.f32 %v1459
        %vm1477 = vweird.f32 %v1470
        %vm1478 = vmor %vm1476, %vm1477
        %v1479 = vsel %vm1478, %v1470, %v1475
        %v1480 = vmul.f32 %v1442, %v1469
        %v1481 = vmul.f32 %v1443, %v1479
        %v1482 = vmul.f32 %v1480, %v369
        %v1483 = vmul.f32 %v1481, %v515
        %v1484 = vrot.slane %v1482, 4
        %v1485 = vadd.f32 %v1482, %v1484
        %v1486 = vrot.slane %v1485, 2
        %v1487 = vadd.f32 %v1485, %v1486
        %v1488 = vrot.slane %v1487, 1
        %v1489 = vadd.f32 %v1487, %v1488
        %v1490 = vrot.slane %v1483, 4
        %v1491 = vadd.f32 %v1483, %v1490
        %v1492 = vrot.slane %v1491, 2
        %v1493 = vadd.f32 %v1491, %v1492
        %v1494 = vrot.slane %v1493, 1
        %v1495 = vadd.f32 %v1493, %v1494
        %v1496 = vmul.f32 %v1480, %v676
        %v1497 = vmul.f32 %v1481, %v822
        %v1498 = vrot.slane %v1496, 4
        %v1499 = vadd.f32 %v1496, %v1498
        %v1500 = vrot.slane %v1499, 2
        %v1501 = vadd.f32 %v1499, %v1500
        %v1502 = vrot.slane %v1501, 1
        %v1503 = vadd.f32 %v1501, %v1502
        %v1504 = vrot.slane %v1497, 4
        %v1505 = vadd.f32 %v1497, %v1504
        %v1506 = vrot.slane %v1505, 2
        %v1507 = vadd.f32 %v1505, %v1506
        %v1508 = vrot.slane %v1507, 1
        %v1509 = vadd.f32 %v1507, %v1508
        %v1510 = vmul.f32 %v1480, %v981
        %v1511 = vmul.f32 %v1481, %v1127
        %v1512 = vrot.slane %v1510, 4
        %v1513 = vadd.f32 %v1510, %v1512
        %v1514 = vrot.slane %v1513, 2
        %v1515 = vadd.f32 %v1513, %v1514
        %v1516 = vrot.slane %v1515, 1
        %v1517 = vadd.f32 %v1515, %v1516
        %v1518 = vrot.slane %v1511, 4
        %v1519 = vadd.f32 %v1511, %v1518
        %v1520 = vrot.slane %v1519, 2
        %v1521 = vadd.f32 %v1519, %v1520
        %v1522 = vrot.slane %v1521, 1
        %v1523 = vadd.f32 %v1521, %v1522
        %v1524 = vmul.f32 %v1480, %v1288
        %v1525 = vmul.f32 %v1481, %v1434
        %v1526 = vrot.slane %v1524, 4
        %v1527 = vadd.f32 %v1524, %v1526
        %v1528 = vrot.slane %v1527, 2
        %v1529 = vadd.f32 %v1527, %v1528
        %v1530 = vrot.slane %v1529, 1
        %v1531 = vadd.f32 %v1529, %v1530
        %v1532 = vrot.slane %v1525, 4
        %v1533 = vadd.f32 %v1525, %v1532
        %v1534 = vrot.slane %v1533, 2
        %v1535 = vadd.f32 %v1533, %v1534
        %v1536 = vrot.slane %v1535, 1
        %v1537 = vadd.f32 %v1535, %v1536
        %v1538 = vxor.u32 %v1489, 2147483648
        %v1539 = vxor.u32 %v1495, 2147483648
        %v1540 = vmul.f32 %v1538, 1.442695
        %v1541 = vpow.pop %v1540
        %v1542 = vmul.f32 %v1539, 1.442695
        %v1543 = vpow.pop %v1542
        %v1544 = vadd.f32 %v1541, 1.0
        %v1545 = vadd.f32 %v1543, 1.0
        %v1546 = vrcp.pop %v1544
        %v1547 = vmul.f32 %v1544, %v1546
        %v1548 = vsub.f32 1.0, %v1547
        %v1549 = vmul.f32 %v1546, %v1548
        %v1550 = vadd.f32 %v1546, %v1549
        %vm1551 = vweird.f32 %v1544
        %vm1552 = vweird.f32 %v1546
        %vm1553 = vmor %vm1551, %vm1552
        %v1554 = vsel %vm1553, %v1546, %v1550
        %v1555 = vand.u32 2147483647, %v1544
        %vm1556 = vcmp.eq.f32.partialorder %v1555, 8.507059e+37
        %v1557 = vand.u32 %v1544, 2147483648
        %v1558 = vor.u32 1.1754944e-38, %v1557
        %v1559 = vsel %vm1556, %v1558, %v1554
        %v1560 = vmul.f32 1.0, %v1559
        %v1561 = vrcp.pop %v1545
        %v1562 = vmul.f32 %v1545, %v1561
        %v1563 = vsub.f32 1.0, %v1562
        %v1564 = vmul.f32 %v1561, %v1563
        %v1565 = vadd.f32 %v1561, %v1564
        %vm1566 = vweird.f32 %v1545
        %vm1567 = vweird.f32 %v1561
        %vm1568 = vmor %vm1566, %vm1567
        %v1569 = vsel %vm1568, %v1561, %v1565
        %v1570 = vand.u32 2147483647, %v1545
        %vm1571 = vcmp.eq.f32.partialorder %v1570, 8.507059e+37
        %v1572 = vand.u32 %v1545, 2147483648
        %v1573 = vor.u32 1.1754944e-38, %v1572
        %v1574 = vsel %vm1571, %v1573, %v1569
        %v1575 = vmul.f32 1.0, %v1574
        %v1576 = vmul.f32 %v1560, %v369
        %v1577 = vmul.f32 %v1575, %v515
        %v1578 = vxor.u32 %v1503, 2147483648
        %v1579 = vxor.u32 %v1509, 2147483648
        %v1580 = vmul.f32 %v1578, 1.442695
        %v1581 = vpow.pop %v1580
        %v1582 = vmul.f32 %v1579, 1.442695
        %v1583 = vpow.pop %v1582
        %v1584 = vadd.f32 %v1581, 1.0
        %v1585 = vadd.f32 %v1583, 1.0
        %v1586 = vrcp.pop %v1584
        %v1587 = vmul.f32 %v1584, %v1586
        %v1588 = vsub.f32 1.0, %v1587
        %v1589 = vmul.f32 %v1586, %v1588
        %v1590 = vadd.f32 %v1586, %v1589
        %vm1591 = vweird.f32 %v1584
        %vm1592 = vweird.f32 %v1586
        %vm1593 = vmor %vm1591, %vm1592
        %v1594 = vsel %vm1593, %v1586, %v1590
        %v1595 = vand.u32 2147483647, %v1584
        %vm1596 = vcmp.eq.f32.partialorder %v1595, 8.507059e+37
        %v1597 = vand.u32 %v1584, 2147483648
        %v1598 = vor.u32 1.1754944e-38, %v1597
        %v1599 = vsel %vm1596, %v1598, %v1594
        %v1600 = vmul.f32 1.0, %v1599
        %v1601 = vrcp.pop %v1585
        %v1602 = vmul.f32 %v1585, %v1601
        %v1603 = vsub.f32 1.0, %v1602
        %v1604 = vmul.f32 %v1601, %v1603
        %v1605 = vadd.f32 %v1601, %v1604
        %vm1606 = vweird.f32 %v1585
        %vm1607 = vweird.f32 %v1601
        %vm1608 = vmor %vm1606, %vm1607
        %v1609 = vsel %vm1608, %v1601, %v1605
        %v1610 = vand.u32 2147483647, %v1585
        %vm1611 = vcmp.eq.f32.partialorder %v1610, 8.507059e+37
        %v1612 = vand.u32 %v1585, 2147483648
        %v1613 = vor.u32 1.1754944e-38, %v1612
        %v1614 = vsel %vm1611, %v1613, %v1609
        %v1615 = vmul.f32 1.0, %v1614
        %v1616 = vmul.f32 %v1600, %v676
        %v1617 = vmul.f32 %v1615, %v822
        %v1618 = vadd.f32 %v1576, %v1616
        %v1619 = vadd.f32 %v1577, %v1617
        %v1620 = vxor.u32 %v1517, 2147483648
        %v1621 = vxor.u32 %v1523, 2147483648
        %v1622 = vmul.f32 %v1620, 1.442695
        %v1623 = vpow.pop %v1622
        %v1624 = vmul.f32 %v1621, 1.442695
        %v1625 = vpow.pop %v1624
        %v1626 = vadd.f32 %v1623, 1.0
        %v1627 = vadd.f32 %v1625, 1.0
        %v1628 = vrcp.pop %v1626
        %v1629 = vmul.f32 %v1626, %v1628
        %v1630 = vsub.f32 1.0, %v1629
        %v1631 = vmul.f32 %v1628, %v1630
        %v1632 = vadd.f32 %v1628, %v1631
        %vm1633 = vweird.f32 %v1626
        %vm1634 = vweird.f32 %v1628
        %vm1635 = vmor %vm1633, %vm1634
        %v1636 = vsel %vm1635, %v1628, %v1632
        %v1637 = vand.u32 2147483647, %v1626
        %vm1638 = vcmp.eq.f32.partialorder %v1637, 8.507059e+37
        %v1639 = vand.u32 %v1626, 2147483648
        %v1640 = vor.u32 1.1754944e-38, %v1639
        %v1641 = vsel %vm1638, %v1640, %v1636
        %v1642 = vmul.f32 1.0, %v1641
        %v1643 = vrcp.pop %v1627
        %v1644 = vmul.f32 %v1627, %v1643
        %v1645 = vsub.f32 1.0, %v1644
        %v1646 = vmul.f32 %v1643, %v1645
        %v1647 = vadd.f32 %v1643, %v1646
        %vm1648 = vweird.f32 %v1627
        %vm1649 = vweird.f32 %v1643
        %vm1650 = vmor %vm1648, %vm1649
        %v1651 = vsel %vm1650, %v1643, %v1647
        %v1652 = vand.u32 2147483647, %v1627
        %vm1653 = vcmp.eq.f32.partialorder %v1652, 8.507059e+37
        %v1654 = vand.u32 %v1627, 2147483648
        %v1655 = vor.u32 1.1754944e-38, %v1654
        %v1656 = vsel %vm1653, %v1655, %v1651
        %v1657 = vmul.f32 1.0, %v1656
        %v1658 = vmul.f32 %v1642, %v981
        %v1659 = vmul.f32 %v1657, %v1127
        %v1660 = vadd.f32 %v1618, %v1658
        %v1661 = vadd.f32 %v1619, %v1659
        %v1662 = vxor.u32 %v1531, 2147483648
        %v1663 = vxor.u32 %v1537, 2147483648
        %v1664 = vmul.f32 %v1662, 1.442695
        %v1665 = vpow.pop %v1664
        %v1666 = vmul.f32 %v1663, 1.442695
        %v1667 = vpow.pop %v1666
        %v1668 = vadd.f32 %v1665, 1.0
        %v1669 = vadd.f32 %v1667, 1.0
        %v1670 = vrcp.pop %v1668
        %v1671 = vmul.f32 %v1668, %v1670
        %v1672 = vsub.f32 1.0, %v1671
        %v1673 = vmul.f32 %v1670, %v1672
        %v1674 = vadd.f32 %v1670, %v1673
        %vm1675 = vweird.f32 %v1668
        %vm1676 = vweird.f32 %v1670
        %vm1677 = vmor %vm1675, %vm1676
        %v1678 = vsel %vm1677, %v1670, %v1674
        %v1679 = vand.u32 2147483647, %v1668
        %vm1680 = vcmp.eq.f32.partialorder %v1679, 8.507059e+37
        %v1681 = vand.u32 %v1668, 2147483648
        %v1682 = vor.u32 1.1754944e-38, %v1681
        %v1683 = vsel %vm1680, %v1682, %v1678
        %v1684 = vmul.f32 1.0, %v1683
        %v1685 = vrcp.pop %v1669
        %v1686 = vmul.f32 %v1669, %v1685
        %v1687 = vsub.f32 1.0, %v1686
        %v1688 = vmul.f32 %v1685, %v1687
        %v1689 = vadd.f32 %v1685, %v1688
        %vm1690 = vweird.f32 %v1669
        %vm1691 = vweird.f32 %v1685
        %vm1692 = vmor %vm1690, %vm1691
        %v1693 = vsel %vm1692, %v1685, %v1689
        %v1694 = vand.u32 2147483647, %v1669
        %vm1695 = vcmp.eq.f32.partialorder %v1694, 8.507059e+37
        %v1696 = vand.u32 %v1669, 2147483648
        %v1697 = vor.u32 1.1754944e-38, %v1696
        %v1698 = vsel %vm1695, %v1697, %v1693
        %v1699 = vmul.f32 1.0, %v1698
        %v1700 = vmul.f32 %v1684, %v1288
        %v1701 = vmul.f32 %v1699, %v1434
        %v1702 = vadd.f32 %v1660, %v1700
        %v1703 = vadd.f32 %v1661, %v1701
        %v1704 = vmul.f32 %v1702, %v1702
        %v1705 = vmul.f32 %v1703, %v1703
        %v1706 = vrot.slane %v1704, 4
        %v1707 = vadd.f32 %v1704, %v1706
        %v1708 = vrot.slane %v1707, 2
        %v1709 = vadd.f32 %v1707, %v1708
        %v1710 = vrot.slane %v1709, 1
        %v1711 = vadd.f32 %v1709, %v1710
        %v1712 = vrot.slane %v1705, 4
        %v1713 = vadd.f32 %v1705, %v1712
        %v1714 = vrot.slane %v1713, 2
        %v1715 = vadd.f32 %v1713, %v1714
        %v1716 = vrot.slane %v1715, 1
        %v1717 = vadd.f32 %v1715, %v1716
        %v1718 = vmax.f32 %v1711, 1e-24
        %v1719 = vmax.f32 %v1717, 1e-24
        %v1720 = vrsqrt.pop %v1718
        %v1721 = vmul.f32 %v1720, %v1718
        %v1722 = vmul.f32 %v1721, %v1720
        %v1723 = vmul.f32 0.5, %v1722
        %v1724 = vsub.f32 1.5, %v1723
        %v1725 = vmul.f32 %v1720, %v1724
        %vm1726 = vweird.f32 %v1718
        %vm1727 = vweird.f32 %v1720
        %vm1728 = vmor %vm1726, %vm1727
        %v1729 = vsel %vm1728, %v1720, %v1725
        %v1730 = vrsqrt.pop %v1719
        %v1731 = vmul.f32 %v1730, %v1719
        %v1732 = vmul.f32 %v1731, %v1730
        %v1733 = vmul.f32 0.5, %v1732
        %v1734 = vsub.f32 1.5, %v1733
        %v1735 = vmul.f32 %v1730, %v1734
        %vm1736 = vweird.f32 %v1719
        %vm1737 = vweird.f32 %v1730
        %vm1738 = vmor %vm1736, %vm1737
        %v1739 = vsel %vm1738, %v1730, %v1735
        %v1740 = vmul.f32 %v1702, %v1729
        %v1741 = vmul.f32 %v1703, %v1739
        %v1742 = vmul.f32 %v1740, %v369
        %v1743 = vmul.f32 %v1741, %v515
        %v1744 = vrot.slane %v1742, 4
        %v1745 = vadd.f32 %v1742, %v1744
        %v1746 = vrot.slane %v1745, 2
        %v1747 = vadd.f32 %v1745, %v1746
        %v1748 = vrot.slane %v1747, 1
        %v1749 = vadd.f32 %v1747, %v1748
        %v1750 = vrot.slane %v1743, 4
        %v1751 = vadd.f32 %v1743, %v1750
        %v1752 = vrot.slane %v1751, 2
        %v1753 = vadd.f32 %v1751, %v1752
        %v1754 = vrot.slane %v1753, 1
        %v1755 = vadd.f32 %v1753, %v1754
        %v1756 = vadd.f32 %v1489, %v1749
        %v1757 = vadd.f32 %v1495, %v1755
        %v1758 = vmul.f32 %v1740, %v676
        %v1759 = vmul.f32 %v1741, %v822
        %v1760 = vrot.slane %v1758, 4
        %v1761 = vadd.f32 %v1758, %v1760
        %v1762 = vrot.slane %v1761, 2
        %v1763 = vadd.f32 %v1761, %v1762
        %v1764 = vrot.slane %v1763, 1
        %v1765 = vadd.f32 %v1763, %v1764
        %v1766 = vrot.slane %v1759, 4
        %v1767 = vadd.f32 %v1759, %v1766
        %v1768 = vrot.slane %v1767, 2
        %v1769 = vadd.f32 %v1767, %v1768
        %v1770 = vrot.slane %v1769, 1
        %v1771 = vadd.f32 %v1769, %v1770
        %v1772 = vadd.f32 %v1503, %v1765
        %v1773 = vadd.f32 %v1509, %v1771
        %v1774 = vmul.f32 %v1740, %v981
        %v1775 = vmul.f32 %v1741, %v1127
        %v1776 = vrot.slane %v1774, 4
        %v1777 = vadd.f32 %v1774, %v1776
        %v1778 = vrot.slane %v1777, 2
        %v1779 = vadd.f32 %v1777, %v1778
        %v1780 = vrot.slane %v1779, 1
        %v1781 = vadd.f32 %v1779, %v1780
        %v1782 = vrot.slane %v1775, 4
        %v1783 = vadd.f32 %v1775, %v1782
        %v1784 = vrot.slane %v1783, 2
        %v1785 = vadd.f32 %v1783, %v1784
        %v1786 = vrot.slane %v1785, 1
        %v1787 = vadd.f32 %v1785, %v1786
        %v1788 = vadd.f32 %v1517, %v1781
        %v1789 = vadd.f32 %v1523, %v1787
        %v1790 = vmul.f32 %v1740, %v1288
        %v1791 = vmul.f32 %v1741, %v1434
        %v1792 = vrot.slane %v1790, 4
        %v1793 = vadd.f32 %v1790, %v1792
        %v1794 = vrot.slane %v1793, 2
        %v1795 = vadd.f32 %v1793, %v1794
        %v1796 = vrot.slane %v1795, 1
        %v1797 = vadd.f32 %v1795, %v1796
        %v1798 = vrot.slane %v1791, 4
        %v1799 = vadd.f32 %v1791, %v1798
        %v1800 = vrot.slane %v1799, 2
        %v1801 = vadd.f32 %v1799, %v1800
        %v1802 = vrot.slane %v1801, 1
        %v1803 = vadd.f32 %v1801, %v1802
        %v1804 = vadd.f32 %v1531, %v1797
        %v1805 = vadd.f32 %v1537, %v1803
        %v1806 = vxor.u32 %v1756, 2147483648
        %v1807 = vxor.u32 %v1757, 2147483648
        %v1808 = vmul.f32 %v1806, 1.442695
        %v1809 = vpow.pop %v1808
        %v1810 = vmul.f32 %v1807, 1.442695
        %v1811 = vpow.pop %v1810
        %v1812 = vadd.f32 %v1809, 1.0
        %v1813 = vadd.f32 %v1811, 1.0
        %v1814 = vrcp.pop %v1812
        %v1815 = vmul.f32 %v1812, %v1814
        %v1816 = vsub.f32 1.0, %v1815
        %v1817 = vmul.f32 %v1814, %v1816
        %v1818 = vadd.f32 %v1814, %v1817
        %vm1819 = vweird.f32 %v1812
        %vm1820 = vweird.f32 %v1814
        %vm1821 = vmor %vm1819, %vm1820
        %v1822 = vsel %vm1821, %v1814, %v1818
        %v1823 = vand.u32 2147483647, %v1812
        %vm1824 = vcmp.eq.f32.partialorder %v1823, 8.507059e+37
        %v1825 = vand.u32 %v1812, 2147483648
        %v1826 = vor.u32 1.1754944e-38, %v1825
        %v1827 = vsel %vm1824, %v1826, %v1822
        %v1828 = vmul.f32 1.0, %v1827
        %v1829 = vrcp.pop %v1813
        %v1830 = vmul.f32 %v1813, %v1829
        %v1831 = vsub.f32 1.0, %v1830
        %v1832 = vmul.f32 %v1829, %v1831
        %v1833 = vadd.f32 %v1829, %v1832
        %vm1834 = vweird.f32 %v1813
        %vm1835 = vweird.f32 %v1829
        %vm1836 = vmor %vm1834, %vm1835
        %v1837 = vsel %vm1836, %v1829, %v1833
        %v1838 = vand.u32 2147483647, %v1813
        %vm1839 = vcmp.eq.f32.partialorder %v1838, 8.507059e+37
        %v1840 = vand.u32 %v1813, 2147483648
        %v1841 = vor.u32 1.1754944e-38, %v1840
        %v1842 = vsel %vm1839, %v1841, %v1837
        %v1843 = vmul.f32 1.0, %v1842
        %v1844 = vmul.f32 %v1828, %v369
        %v1845 = vmul.f32 %v1843, %v515
        %v1846 = vxor.u32 %v1772, 2147483648
        %v1847 = vxor.u32 %v1773, 2147483648
        %v1848 = vmul.f32 %v1846, 1.442695
        %v1849 = vpow.pop %v1848
        %v1850 = vmul.f32 %v1847, 1.442695
        %v1851 = vpow.pop %v1850
        %v1852 = vadd.f32 %v1849, 1.0
        %v1853 = vadd.f32 %v1851, 1.0
        %v1854 = vrcp.pop %v1852
        %v1855 = vmul.f32 %v1852, %v1854
        %v1856 = vsub.f32 1.0, %v1855
        %v1857 = vmul.f32 %v1854, %v1856
        %v1858 = vadd.f32 %v1854, %v1857
        %vm1859 = vweird.f32 %v1852
        %vm1860 = vweird.f32 %v1854
        %vm1861 = vmor %vm1859, %vm1860
        %v1862 = vsel %vm1861, %v1854, %v1858
        %v1863 = vand.u32 2147483647, %v1852
        %vm1864 = vcmp.eq.f32.partialorder %v1863, 8.507059e+37
        %v1865 = vand.u32 %v1852, 2147483648
        %v1866 = vor.u32 1.1754944e-38, %v1865
        %v1867 = vsel %vm1864, %v1866, %v1862
        %v1868 = vmul.f32 1.0, %v1867
        %v1869 = vrcp.pop %v1853
        %v1870 = vmul.f32 %v1853, %v1869
        %v1871 = vsub.f32 1.0, %v1870
        %v1872 = vmul.f32 %v1869, %v1871
        %v1873 = vadd.f32 %v1869, %v1872
        %vm1874 = vweird.f32 %v1853
        %vm1875 = vweird.f32 %v1869
        %vm1876 = vmor %vm1874, %vm1875
        %v1877 = vsel %vm1876, %v1869, %v1873
        %v1878 = vand.u32 2147483647, %v1853
        %vm1879 = vcmp.eq.f32.partialorder %v1878, 8.507059e+37
        %v1880 = vand.u32 %v1853, 2147483648
        %v1881 = vor.u32 1.1754944e-38, %v1880
        %v1882 = vsel %vm1879, %v1881, %v1877
        %v1883 = vmul.f32 1.0, %v1882
        %v1884 = vmul.f32 %v1868, %v676
        %v1885 = vmul.f32 %v1883, %v822
        %v1886 = vadd.f32 %v1844, %v1884
        %v1887 = vadd.f32 %v1845, %v1885
        %v1888 = vxor.u32 %v1788, 2147483648
        %v1889 = vxor.u32 %v1789, 2147483648
        %v1890 = vmul.f32 %v1888, 1.442695
        %v1891 = vpow.pop %v1890
        %v1892 = vmul.f32 %v1889, 1.442695
        %v1893 = vpow.pop %v1892
        %v1894 = vadd.f32 %v1891, 1.0
        %v1895 = vadd.f32 %v1893, 1.0
        %v1896 = vrcp.pop %v1894
        %v1897 = vmul.f32 %v1894, %v1896
        %v1898 = vsub.f32 1.0, %v1897
        %v1899 = vmul.f32 %v1896, %v1898
        %v1900 = vadd.f32 %v1896, %v1899
        %vm1901 = vweird.f32 %v1894
        %vm1902 = vweird.f32 %v1896
        %vm1903 = vmor %vm1901, %vm1902
        %v1904 = vsel %vm1903, %v1896, %v1900
        %v1905 = vand.u32 2147483647, %v1894
        %vm1906 = vcmp.eq.f32.partialorder %v1905, 8.507059e+37
        %v1907 = vand.u32 %v1894, 2147483648
        %v1908 = vor.u32 1.1754944e-38, %v1907
        %v1909 = vsel %vm1906, %v1908, %v1904
        %v1910 = vmul.f32 1.0, %v1909
        %v1911 = vrcp.pop %v1895
        %v1912 = vmul.f32 %v1895, %v1911
        %v1913 = vsub.f32 1.0, %v1912
        %v1914 = vmul.f32 %v1911, %v1913
        %v1915 = vadd.f32 %v1911, %v1914
        %vm1916 = vweird.f32 %v1895
        %vm1917 = vweird.f32 %v1911
        %vm1918 = vmor %vm1916, %vm1917
        %v1919 = vsel %vm1918, %v1911, %v1915
        %v1920 = vand.u32 2147483647, %v1895
        %vm1921 = vcmp.eq.f32.partialorder %v1920, 8.507059e+37
        %v1922 = vand.u32 %v1895, 2147483648
        %v1923 = vor.u32 1.1754944e-38, %v1922
        %v1924 = vsel %vm1921, %v1923, %v1919
        %v1925 = vmul.f32 1.0, %v1924
        %v1926 = vmul.f32 %v1910, %v981
        %v1927 = vmul.f32 %v1925, %v1127
        %v1928 = vadd.f32 %v1886, %v1926
        %v1929 = vadd.f32 %v1887, %v1927
        %v1930 = vxor.u32 %v1804, 2147483648
        %v1931 = vxor.u32 %v1805, 2147483648
        %v1932 = vmul.f32 %v1930, 1.442695
        %v1933 = vpow.pop %v1932
        %v1934 = vmul.f32 %v1931, 1.442695
        %v1935 = vpow.pop %v1934
        %v1936 = vadd.f32 %v1933, 1.0
        %v1937 = vadd.f32 %v1935, 1.0
        %v1938 = vrcp.pop %v1936
        %v1939 = vmul.f32 %v1936, %v1938
        %v1940 = vsub.f32 1.0, %v1939
        %v1941 = vmul.f32 %v1938, %v1940
        %v1942 = vadd.f32 %v1938, %v1941
        %vm1943 = vweird.f32 %v1936
        %vm1944 = vweird.f32 %v1938
        %vm1945 = vmor %vm1943, %vm1944
        %v1946 = vsel %vm1945, %v1938, %v1942
        %v1947 = vand.u32 2147483647, %v1936
        %vm1948 = vcmp.eq.f32.partialorder %v1947, 8.507059e+37
        %v1949 = vand.u32 %v1936, 2147483648
        %v1950 = vor.u32 1.1754944e-38, %v1949
        %v1951 = vsel %vm1948, %v1950, %v1946
        %v1952 = vmul.f32 1.0, %v1951
        %v1953 = vrcp.pop %v1937
        %v1954 = vmul.f32 %v1937, %v1953
        %v1955 = vsub.f32 1.0, %v1954
        %v1956 = vmul.f32 %v1953, %v1955
        %v1957 = vadd.f32 %v1953, %v1956
        %vm1958 = vweird.f32 %v1937
        %vm1959 = vweird.f32 %v1953
        %vm1960 = vmor %vm1958, %vm1959
        %v1961 = vsel %vm1960, %v1953, %v1957
        %v1962 = vand.u32 2147483647, %v1937
        %vm1963 = vcmp.eq.f32.partialorder %v1962, 8.507059e+37
        %v1964 = vand.u32 %v1937, 2147483648
        %v1965 = vor.u32 1.1754944e-38, %v1964
        %v1966 = vsel %vm1963, %v1965, %v1961
        %v1967 = vmul.f32 1.0, %v1966
        %v1968 = vmul.f32 %v1952, %v1288
        %v1969 = vmul.f32 %v1967, %v1434
        %v1970 = vadd.f32 %v1928, %v1968
        %v1971 = vadd.f32 %v1929, %v1969
        %v1972 = vld [vmem:[%s2] sm:$0xff]
        %1974 = vset.pattern.permute.xlu0 0
        %1975 = vperm.xlu0 %1974, %v1972
        %v1976 = vpop.permute.xlu0 %1975
        %v1978 = vadd.f32 %v1970, %v1976
        %v1979 = vadd.f32 %v1971, %v1976
        %1980 = vst [vmem:[%s208] sm:$0xff] %v1978
        %1981 = vst [vmem:[%s208 + $0x8] sm:$0xff] %v1979
        %s1982 = sand.u32 %s112, 1
        %s1983 = scalar_lea.sflag [#allocation4], %s1982
        %s1984 = sand.u32 %s112, 1
        %s1985 = smul.addr %s1984, 16
        %s1986 = scalar_lea.vmem [#allocation5], %s1985
        // Predicated region
        $region37: #{tpu_custom_call.1} parent=31 // pred_check
          %p1987 = pneg %p122
        $region38: #{tpu_custom_call.1} parent=31 // pred_check_branch
          %1989 = sbr.rel (%p1987) target = $region40
        $region39: #{tpu_custom_call.1} parent=31 // pred_region
          %s1990 = smul.u32 2, %s25
          %1992 = vsyncadd %s1983, 0
          %s1993 = smul.addr %s24, 2
          %s1994 = sadd.s32 %s1990, %s1993
          %s1995 = smul.addr %s1994, 8
          %s1996 = scalar_lea.hbm %s3, %s1995
          %s1998 = sshll.u32 %s1986, 4
          %s1999 = int_to_ptr.vmem [resolvable:$true] %s1998
          %s2000 = sshll.u32 %s1996, 4
          %s2001 = int_to_ptr.hbm [resolvable:$true] %s2000
          %2003 = dma.vmem_to_hbm [thread:$0]  %s1999, 256, %s2001, %s1983
        $region40: #{tpu_custom_call.1} parent=31 // pred_fallthru
          _
      $region32: #{tpu_custom_call.1} parent=5 // pred_fallthru
        _
      %p2004 = scmp.le.s32.totalorder 2, %s15
      // Predicated region
      $region41: #{tpu_custom_call.1} parent=5 // pred_check
        %p2005 = pneg %p2004
      $region42: #{tpu_custom_call.1} parent=5 // pred_check_branch
        %2007 = sbr.rel (%p2005) target = $region44
      $region43: #{tpu_custom_call.1} parent=5 // pred_region
        %s2008 = ssub.s32 %s15, 2
        // Predicated region
        $region45: #{tpu_custom_call.1} parent=43 // pred_check
          %p2009 = pneg %p128
        $region46: #{tpu_custom_call.1} parent=43 // pred_check_branch
          %2011 = sbr.rel (%p2009) target = $region48
        $region47: #{tpu_custom_call.1} parent=43 // pred_region
          %s2012 = sand.u32 %s113, 1
          %s2013 = scalar_lea.sflag [#allocation4], %s2012
          %s2014 = sand.u32 %s113, 1
          %s2015 = smul.addr %s2014, 16
          %s2016 = scalar_lea.vmem [#allocation5], %s2015
          %2018 = dma.done %s2013, 256
        $region48: #{tpu_custom_call.1} parent=43 // pred_fallthru
          _
      $region44: #{tpu_custom_call.1} parent=5 // pred_fallthru
        _
    $region6: #{tpu_custom_call.1} parent=1 // loop_footer
      %s19 = sadd.s32 1, %s15
    $region7: #{tpu_custom_call.1} parent=1 // loop_footer_branch
      %14 = sbr.rel target = $region3
    $region8: #{tpu_custom_call.1} parent=1 // loop_exit
      _
    %2019 = vsyncpa [#allocation3], 1
    %s2020 = scalar_lea.sflag [#allocation3], 1
    %2021 = vsyncpa %s2020, 1
    %2022 = vsyncpa [#allocation4], 1
    %s2023 = scalar_lea.sflag [#allocation4], 1
    %2024 = vsyncpa %s2023, 1

</llo_original>
